<compile_context>
chip_gen: v5e
topology: v5e:2x2
jax: 0.10.0
libtpu: 0.0.40
codegen_flags: <defaults>
</compile_context>

<pallas_src>
import numpy as np
import jax
import jax.numpy as jnp
from jax.experimental import pallas as pl
from jax.experimental.pallas import tpu as pltpu


_VMEM_TILE_BUDGET = 24 * 1024 * 1024   # bytes for double-buffered batch tiles
_VMEM_LIMIT_BYTES = 32 * 1024 * 1024   # scoped-VMEM request (<= v7x 64 MiB)


def _round_up(x, m):
    return (x + m - 1) // m * m


def _auto_block_rows(B, D, act_itemsize):
    """Largest batch tile whose double-buffered footprint fits the budget."""
    # Per batch row, double-buffered: 4 activation streams + rels(i32) + out(f32).
    per_row = 2 * (4 * D * act_itemsize + 4 + 4)
    tb = _VMEM_TILE_BUDGET // max(per_row, 1)
    tb = max(8, min(2048, (tb // 8) * 8))
    return min(tb, _round_up(B, 8))


def _hake_kernel(lam_ref, rels_ref, tab_mp_ref,
                 head_m_ref, tail_m_ref, head_p_ref, tail_p_ref, out_ref):
    tb = head_m_ref.shape[0]
    d = head_m_ref.shape[1]
    n_rels_p = tab_mp_ref.shape[0]

    # --- in-kernel relation gather: one-hot @ (modulus|phase) table ---------
    # Single matmul on the otherwise-idle MXU; precision=HIGHEST keeps the f32
    # table exact through the MXU datapath (default would truncate to bf16).
    idx = rels_ref[...]                                            # (TB, 1) i32
    iota = jax.lax.broadcasted_iota(jnp.int32, (tb, n_rels_p), 1)
    onehot = (iota == idx).astype(jnp.float32)                     # (TB, n_rels_p)
    rel_mp = jnp.dot(onehot, tab_mp_ref[...],
                     preferred_element_type=jnp.float32,
                     precision=jax.lax.Precision.HIGHEST)          # (TB, 2D)
    rel_m = rel_mp[:, :d]
    rel_p = rel_mp[:, d:]

    # Upcast in-kernel (inputs may be bf16 in HBM); accumulate in f32.
    head_m = head_m_ref[...].astype(jnp.float32)
    tail_m = tail_m_ref[...].astype(jnp.float32)
    head_p = head_p_ref[...].astype(jnp.float32)
    tail_p = tail_p_ref[...].astype(jnp.float32)

    # --- d_m = || head_m * rel_m - tail_m ||_2 -------------------------------
    dm_vec = head_m * rel_m - tail_m
    d_m = jnp.sqrt(jnp.sum(dm_vec * dm_vec, axis=-1, keepdims=True))   # (TB,1)

    # --- d_p = || sin((head_p + rel_p - tail_p) / 2) ||_1 --------------------
    val = jnp.sin((head_p + rel_p - tail_p) * 0.5)
    d_p = jnp.sum(jnp.abs(val), axis=-1, keepdims=True)                # (TB,1)

    lam = lam_ref[0]
    lam2 = lam_ref[1]
    out_ref[...] = -(lam2 * d_m + lam * d_p)


def hake_forward(h_head_m, h_tail_m, h_head_p, h_tail_p, rels,
                 rel_weight, lam, lam2, *, block_rows=None):
    """Pallas-backed HAKE.forward.  Returns score of shape (B,), float32.

    Caller contract: the four (B, D) activation arrays are streamed from HBM
    in the dtype they are handed in (feed bf16 to halve DMA bytes on this
    HBM-bound kernel); the kernel upcasts to f32 internally.  Do NOT cast up
    at the call site.
    """
    B, D = h_head_m.shape
    n_rels, dim = rel_weight.shape
    assert dim == 2 * D, "rel_weight feature dim must be 2 * D"

    # --- per-relation transform, hoisted out of the batch loop (tiny op) ----
    # Computed once in plain JAX (exact torch semantics incl. atan2(0,0)=0),
    # concatenated so the kernel performs ONE gather matmul.
    rw = rel_weight.astype(jnp.float32)
    rx, ry = rw[:, :D], rw[:, D:]
    tab_m = jnp.sqrt(rx * rx + ry * ry)                   # modulus table
    tab_p = jnp.arctan2(ry, rx) + jnp.float32(np.pi)      # phase table (exact)
    tab_mp = jnp.concatenate([tab_m, tab_p], axis=-1)     # (n_rels, 2D)

    # Pad relation rows to a sublane multiple; zero rows are never selected.
    n_rels_p = _round_up(n_rels, 8)
    if n_rels_p != n_rels:
        tab_mp = jnp.pad(tab_mp, ((0, n_rels_p - n_rels), (0, 0)))

    # --- batch tiling: VMEM-budget-aware, >=2 grid steps when possible ------
    act_itemsize = jnp.dtype(h_head_m.dtype).itemsize
    if block_rows is None:
        block_rows = _auto_block_rows(B, D, act_itemsize)
    TB = max(8, _round_up(block_rows, 8))
    TB = min(TB, _round_up(B, 8))
    if (B + TB - 1) // TB < 2 and B > 8:
        # Guarantee >=2 grid steps so a "parallel" axis feeds both v7x cores.
        TB = max(8, _round_up((B + 1) // 2, 8))
    Bp = _round_up(B, TB)

    if Bp != B:
        padb = ((0, Bp - B), (0, 0))
        h_head_m = jnp.pad(h_head_m, padb)
        h_tail_m = jnp.pad(h_tail_m, padb)
        h_head_p = jnp.pad(h_head_p, padb)
        h_tail_p = jnp.pad(h_tail_p, padb)
        rels = jnp.pad(rels, ((0, Bp - B),))
    rels2d = rels.astype(jnp.int32).reshape(Bp, 1)

    lam_pack = jnp.concatenate([jnp.reshape(lam, (-1,)),
                                jnp.reshape(lam2, (-1,))]).astype(jnp.float32)

    row_spec = pl.BlockSpec((TB, D), lambda i: (i, 0))
    # Constant index_map -> Pallas only DMAs the table once per kernel launch.
    tab_spec = pl.BlockSpec((n_rels_p, 2 * D), lambda i: (0, 0))

    out = pl.pallas_call(
        _hake_kernel,
        out_shape=jax.ShapeDtypeStruct((Bp, 1), jnp.float32),
        grid=(Bp // TB,),
        in_specs=[
            pl.BlockSpec(memory_space=pltpu.MemorySpace.SMEM),  # [lam, lam2]
            pl.BlockSpec((TB, 1), lambda i: (i, 0)),            # rels
            tab_spec,                                           # rel (mod|phase)
            row_spec, row_spec, row_spec, row_spec,             # m/p inputs
        ],
        out_specs=pl.BlockSpec((TB, 1), lambda i: (i, 0)),
        compiler_params=pltpu.CompilerParams(
            dimension_semantics=("parallel",),
            vmem_limit_bytes=_VMEM_LIMIT_BYTES),
    )(lam_pack, rels2d, tab_mp,
      h_head_m, h_tail_m, h_head_p, h_tail_p)
    return out[:B, 0]


def _reference(h_head_m, h_tail_m, h_head_p, h_tail_p, rels,
               rel_weight, lam, lam2):
    """Pure-JAX reference mirroring the PyTorch module exactly."""
    h_rel = rel_weight[rels]
    rx, ry = jnp.split(h_rel, 2, axis=-1)
    rel_m = jnp.sqrt(rx * rx + ry * ry)
    rel_p = jnp.arctan2(ry, rx) + np.pi
    d_m = jnp.sqrt(jnp.sum((h_head_m * rel_m - h_tail_m) ** 2, axis=-1))
    d_p = jnp.sum(jnp.abs(jnp.sin((h_head_p + rel_p - h_tail_p) / 2.0)), axis=-1)
    return -(lam2 * d_m + lam * d_p)


if __name__ == "__main__":
    # Small, deterministic problem consistent with HAKE(n_rels, dim).
    n_rels, dim = 16, 256          # dim must be even; D = dim // 2 = 128
    D = dim // 2
    B = 100                        # exercises batch padding + multi-step grid

    key = jax.random.PRNGKey(0)
    k = jax.random.split(key, 6)

    # nn.Embedding default init is N(0, 1); lam / lam2 init to 1.0.
    rel_weight = jax.random.normal(k[0], (n_rels, dim), jnp.float32)
    lam = jnp.array([1.0], jnp.float32)
    lam2 = jnp.array([1.0], jnp.float32)

    h_head_m = jnp.abs(jax.random.normal(k[1], (B, D), jnp.float32))
    h_tail_m = jnp.abs(jax.random.normal(k[2], (B, D), jnp.float32))
    h_head_p = jax.random.uniform(k[3], (B, D), jnp.float32, 0.0, 2.0 * np.pi)
    h_tail_p = jax.random.uniform(k[4], (B, D), jnp.float32, 0.0, 2.0 * np.pi)
    rels = jax.random.randint(k[5], (B,), 0, n_rels, jnp.int32)

    ref = _reference(h_head_m, h_tail_m, h_head_p, h_tail_p, rels,
                     rel_weight, lam, lam2)

    # 1) f32 activations, explicit small tile (4-step grid + padded rows).
    s1 = jax.block_until_ready(
        hake_forward(h_head_m, h_tail_m, h_head_p, h_tail_p, rels,
                     rel_weight, lam, lam2, block_rows=32))
    np.testing.assert_allclose(np.asarray(s1), np.asarray(ref),
                               rtol=1e-3, atol=1e-3)

    # 2) f32 activations, automatic VMEM-budget-aware tiling (>=2 grid steps).
    s2 = jax.block_until_ready(
        hake_forward(h_head_m, h_tail_m, h_head_p, h_tail_p, rels,
                     rel_weight, lam, lam2))
    np.testing.assert_allclose(np.asarray(s2), np.asarray(ref),
                               rtol=1e-3, atol=1e-3)

    # 3) bf16 activations streamed straight from HBM (halves DMA bytes);
    #    compare against a reference fed with the SAME bf16-quantized inputs.
    hm_b = h_head_m.astype(jnp.bfloat16)
    tm_b = h_tail_m.astype(jnp.bfloat16)
    hp_b = h_head_p.astype(jnp.bfloat16)
    tp_b = h_tail_p.astype(jnp.bfloat16)
    ref_b = _reference(hm_b.astype(jnp.float32), tm_b.astype(jnp.float32),
                       hp_b.astype(jnp.float32), tp_b.astype(jnp.float32),
                       rels, rel_weight, lam, lam2)
    s3 = jax.block_until_ready(
        hake_forward(hm_b, tm_b, hp_b, tp_b, rels, rel_weight, lam, lam2))
    np.testing.assert_allclose(np.asarray(s3), np.asarray(ref_b),
                               rtol=2e-3, atol=2e-3)

    print("KERNEL_OK")
</pallas_src>

<mosaic_0001>
module attributes {stable_mosaic.version = 11 : i64} {
  func.func @_hake_kernel(%arg0: i32, %arg1: memref<2xf32, #tpu.memory_space<smem>>, %arg2: memref<32x1xi32, #tpu.memory_space<vmem>>, %arg3: memref<16x256xf32, #tpu.memory_space<vmem>>, %arg4: memref<32x128xf32, #tpu.memory_space<vmem>>, %arg5: memref<32x128xf32, #tpu.memory_space<vmem>>, %arg6: memref<32x128xf32, #tpu.memory_space<vmem>>, %arg7: memref<32x128xf32, #tpu.memory_space<vmem>>, %arg8: memref<32x1xf32, #tpu.memory_space<vmem>>) attributes {dimension_semantics = [#tpu.dimension_semantics<parallel>], iteration_bounds = array<i64: 4>, scalar_prefetch = 0 : i64, scratch_operands = 0 : i64, tpu.core_type = #tpu.core_type<tc>, window_params = [{transform_indices = @transform_0, window_bounds = array<i64: 2>}, {transform_indices = @transform_1, window_bounds = array<i64: 32, 1>}, {pipeline_mode = #tpu.pipeline_mode<synchronous>, transform_indices = @transform_2, window_bounds = array<i64: 16, 256>}, {transform_indices = @transform_3, window_bounds = array<i64: 32, 128>}, {transform_indices = @transform_4, window_bounds = array<i64: 32, 128>}, {transform_indices = @transform_5, window_bounds = array<i64: 32, 128>}, {transform_indices = @transform_6, window_bounds = array<i64: 32, 128>}, {transform_indices = @transform_7, window_bounds = array<i64: 32, 1>}]} {
    %c0 = arith.constant 0 : index
    %c0_0 = arith.constant 0 : index
    %0 = vector.load %arg2[%c0, %c0_0] : memref<32x1xi32, #tpu.memory_space<vmem>>, vector<32x1xi32>
    %1 = tpu.iota {dimensions = array<i32: 1>} : vector<32x16xi32>
    %2 = vector.broadcast %0 : vector<32x1xi32> to vector<32x16xi32>
    %3 = arith.cmpi eq, %1, %2 : vector<32x16xi32>
    %4 = arith.extui %3 : vector<32x16xi1> to vector<32x16xi32>
    %5 = arith.sitofp %4 : vector<32x16xi32> to vector<32x16xf32>
    %c0_1 = arith.constant 0 : index
    %c0_2 = arith.constant 0 : index
    %6 = vector.load %arg3[%c0_1, %c0_2] : memref<16x256xf32, #tpu.memory_space<vmem>>, vector<16x256xf32>
    %cst = arith.constant dense<0.000000e+00> : vector<32x256xf32>
    %7 = tpu.matmul %5, %6, %cst {dimension_numbers = #tpu.dot_dimension_numbers<[1], [0], [0], [1], [0, 0, 1, 1], [], []>, precision = #tpu.contract_precision<fp32>} : vector<32x16xf32>, vector<16x256xf32>, vector<32x256xf32> -> vector<32x256xf32>
    %8 = vector.extract_strided_slice %7 {offsets = [0, 0], sizes = [32, 128], strides = [1, 1]} : vector<32x256xf32> to vector<32x128xf32>
    %9 = vector.extract_strided_slice %7 {offsets = [0, 128], sizes = [32, 128], strides = [1, 1]} : vector<32x256xf32> to vector<32x128xf32>
    %c0_3 = arith.constant 0 : index
    %c0_4 = arith.constant 0 : index
    %10 = vector.load %arg4[%c0_3, %c0_4] : memref<32x128xf32, #tpu.memory_space<vmem>>, vector<32x128xf32>
    %c0_5 = arith.constant 0 : index
    %c0_6 = arith.constant 0 : index
    %11 = vector.load %arg5[%c0_5, %c0_6] : memref<32x128xf32, #tpu.memory_space<vmem>>, vector<32x128xf32>
    %c0_7 = arith.constant 0 : index
    %c0_8 = arith.constant 0 : index
    %12 = vector.load %arg6[%c0_7, %c0_8] : memref<32x128xf32, #tpu.memory_space<vmem>>, vector<32x128xf32>
    %c0_9 = arith.constant 0 : index
    %c0_10 = arith.constant 0 : index
    %13 = vector.load %arg7[%c0_9, %c0_10] : memref<32x128xf32, #tpu.memory_space<vmem>>, vector<32x128xf32>
    %14 = arith.mulf %10, %8 : vector<32x128xf32>
    %15 = arith.subf %14, %11 : vector<32x128xf32>
    %16 = arith.mulf %15, %15 : vector<32x128xf32>
    %cst_11 = arith.constant dense<0.000000e+00> : vector<32xf32>
    %17 = vector.multi_reduction <add>, %16, %cst_11 [1] : vector<32x128xf32> to vector<32xf32>
    %18 = vector.shape_cast %17 : vector<32xf32> to vector<32x1xf32>
    %19 = math.sqrt %18 : vector<32x1xf32>
    %20 = arith.addf %12, %9 : vector<32x128xf32>
    %21 = arith.subf %20, %13 : vector<32x128xf32>
    %cst_12 = arith.constant 5.000000e-01 : f32
    %22 = vector.broadcast %cst_12 : f32 to vector<32x128xf32>
    %23 = arith.mulf %21, %22 : vector<32x128xf32>
    %24 = math.sin %23 : vector<32x128xf32>
    %25 = math.absf %24 : vector<32x128xf32>
    %cst_13 = arith.constant dense<0.000000e+00> : vector<32xf32>
    %26 = vector.multi_reduction <add>, %25, %cst_13 [1] : vector<32x128xf32> to vector<32xf32>
    %27 = vector.shape_cast %26 : vector<32xf32> to vector<32x1xf32>
    %c0_14 = arith.constant 0 : index
    %28 = memref.load %arg1[%c0_14] : memref<2xf32, #tpu.memory_space<smem>>
    %c1 = arith.constant 1 : index
    %29 = memref.load %arg1[%c1] : memref<2xf32, #tpu.memory_space<smem>>
    %30 = vector.broadcast %29 : f32 to vector<32x1xf32>
    %31 = arith.mulf %30, %19 : vector<32x1xf32>
    %32 = vector.broadcast %28 : f32 to vector<32x1xf32>
    %33 = arith.mulf %32, %27 : vector<32x1xf32>
    %34 = arith.addf %31, %33 : vector<32x1xf32>
    %cst_15 = arith.constant 0.000000e+00 : f32
    %35 = vector.broadcast %cst_15 : f32 to vector<32x1xf32>
    %36 = arith.subf %35, %34 : vector<32x1xf32>
    %c0_16 = arith.constant 0 : index
    %c0_17 = arith.constant 0 : index
    %37 = vector.load %arg8[%c0_16, %c0_17] : memref<32x1xf32, #tpu.memory_space<vmem>>, vector<32x1xf32>
    tpu.vector_store %arg8[%c0_16, %c0_17], %36 {strides = array<i32>} : memref<32x1xf32, #tpu.memory_space<vmem>>, vector<32x1xf32>,
    return
  }
  func.func @transform_0(%arg0: i32) -> i32 {
    %c0_i32 = arith.constant 0 : i32
    %c0_i32_0 = arith.constant 0 : i32
    return %c0_i32 : i32
  }
  func.func @transform_1(%arg0: i32) -> (i32, i32) {
    %c0_i32 = arith.constant 0 : i32
    %c0_i32_0 = arith.constant 0 : i32
    return %arg0, %c0_i32 : i32, i32
  }
  func.func @transform_2(%arg0: i32) -> (i32, i32) {
    %c0_i32 = arith.constant 0 : i32
    %c0_i32_0 = arith.constant 0 : i32
    %c0_i32_1 = arith.constant 0 : i32
    return %c0_i32, %c0_i32_0 : i32, i32
  }
  func.func @transform_3(%arg0: i32) -> (i32, i32) {
    %c0_i32 = arith.constant 0 : i32
    %c0_i32_0 = arith.constant 0 : i32
    return %arg0, %c0_i32 : i32, i32
  }
  func.func @transform_4(%arg0: i32) -> (i32, i32) {
    %c0_i32 = arith.constant 0 : i32
    %c0_i32_0 = arith.constant 0 : i32
    return %arg0, %c0_i32 : i32, i32
  }
  func.func @transform_5(%arg0: i32) -> (i32, i32) {
    %c0_i32 = arith.constant 0 : i32
    %c0_i32_0 = arith.constant 0 : i32
    return %arg0, %c0_i32 : i32, i32
  }
  func.func @transform_6(%arg0: i32) -> (i32, i32) {
    %c0_i32 = arith.constant 0 : i32
    %c0_i32_0 = arith.constant 0 : i32
    return %arg0, %c0_i32 : i32, i32
  }
  func.func @transform_7(%arg0: i32) -> (i32, i32) {
    %c0_i32 = arith.constant 0 : i32
    %c0_i32_0 = arith.constant 0 : i32
    return %arg0, %c0_i32 : i32, i32
  }
}

</mosaic_0001>

<llo_original>
// kernel: tpu_custom_call.1
$region0: #{tpu_custom_call.1}
  #allocation0 [shape = 'u32[]', space=smem, size = 0x4, offset = 0x4, fixed_abs, tag = 'smem constant byte address 0x4 - core index']
  #allocation1 [shape = 'u32[72,128]{1,0:T(1,128)}', space=vmem, size = 0x9000, scoped, tag = 'internal scratch']
  %s0 = inlined_call_operand.vmem [shape: f32[2], index: 0, kind: input, shape index: {}]
  %s1 = inlined_call_operand.vmem [shape: s32[128,1], index: 1, kind: input, shape index: {}]
  %s2 = inlined_call_operand.hbm [shape: f32[16,256], index: 2, kind: input, shape index: {}]
  %s3 = inlined_call_operand.vmem [shape: f32[128,128], index: 3, kind: input, shape index: {}]
  %s4 = inlined_call_operand.hbm [shape: f32[128,128], index: 4, kind: input, shape index: {}]
  %s5 = inlined_call_operand.hbm [shape: f32[128,128], index: 5, kind: input, shape index: {}]
  %s6 = inlined_call_operand.hbm [shape: f32[128,128], index: 6, kind: input, shape index: {}]
  %s7 = inlined_call_operand.vmem [shape: f32[128,1], index: 7, kind: output, shape index: {}]
  %s8 = sld [smem:[#allocation0]]
  $region81: #{tpu_custom_call.1} parent=0
    _
  %s10 = ssub.s32 1, %s8
  %s11 = scalar_select 0, %s10, %s8
  $region1: #{tpu_custom_call.1} parent=0
    #allocation2 [shape = 'u8[512]{0}', space=smem, size = 0x200, scoped, tag = 'input window, operand 0, single buffered']
    #allocation3 [shape = 's32[2]{0}', space=sflag, size = 0x8, scoped, tag = 'scoped memory for tpu_custom_call.1']
    #allocation4 [shape = 's32[2]{0}', space=sflag, size = 0x8, scoped, tag = 'scoped memory for tpu_custom_call.1']
    #allocation5 [shape = 'u8[16384]{0}', space=vmem, size = 0x4000, scoped, tag = 'input window, operand 2, single buffered']
    #allocation6 [shape = 'u8[32768]{0}', space=vmem, size = 0x8000, scoped, tag = 'input window, operand 4']
    #allocation7 [shape = 's32[2]{0}', space=sflag, size = 0x8, scoped, tag = 'scoped memory for tpu_custom_call.1']
    #allocation8 [shape = 'u8[32768]{0}', space=vmem, size = 0x8000, scoped, tag = 'input window, operand 5']
    #allocation9 [shape = 'u8[32768]{0}', space=vmem, size = 0x8000, scoped, tag = 'input window, operand 6']
    #allocation10 [shape = 's32[2]{0}', space=sflag, size = 0x8, scoped, tag = 'scoped memory for tpu_custom_call.1']
    %12 = vsyncpa [#allocation4], 0
    %13 = vsyncpa [#allocation3], 0
    %14 = vsyncpa [#allocation7], 0
    %s15 = scalar_lea.sflag [#allocation7], 1
    %16 = vsyncpa %s15, 0
    %17 = vsyncpa [#allocation10], 0
    %s18 = scalar_lea.sflag [#allocation10], 1
    %19 = vsyncpa %s18, 0
    loop: start=0, step=1, limit=6
    $region2: #{tpu_custom_call.1} parent=1 // loop_pre_header
      _
    $region3: #{tpu_custom_call.1} parent=1 // loop_header
      %s21 = sphi 0, %s25
      %p22 = scmp.ge.s32.totalorder %s21, 6
      %s29 = sphi 0, %s29
      %s31 = sphi 0, %s29
      %s32 = sphi 0, %s31
      %s46 = sphi 0, %s32
      %s52 = sphi 0, %s54
      %s55 = sphi 0, %s52
      %s56 = sphi 0, %s55
      %s72 = sphi 0, %s56
      %s76 = sphi 0, %s76
      %s78 = sphi 0, %s76
      %s79 = sphi 0, %s78
      %s93 = sphi 0, %s79
      %s99 = sphi 0, %s101
      %s102 = sphi 0, %s99
      %s103 = sphi 0, %s102
      %s119 = sphi 0, %s103
      %s125 = sphi 0, %s127
      %s128 = sphi 0, %s125
      %s129 = sphi 0, %s128
      %s145 = sphi 0, %s129
      %s151 = sphi 0, %s153
      %s154 = sphi 0, %s151
      %s155 = sphi 0, %s154
      %s171 = sphi 0, %s155
      %s177 = sphi 0, %s179
      %s180 = sphi 0, %s177
      %s181 = sphi 0, %s180
      %s197 = sphi 0, %s181
      %s203 = sphi 0, %s205
      %s206 = sphi 0, %s203
      %s207 = sphi 0, %s206
      %s223 = sphi 0, %s207
    $region4: #{tpu_custom_call.1} parent=1 // loop_header_branch
      %24 = sbr.rel (%p22) target = $region8
    $region5: #{tpu_custom_call.1} parent=1 // loop_body
      %s26 = ssub.s32 %s21, 1
      %s27 = ssub.s32 %s21, 2
      %s28 = sadd.s32 %s21, 1
      %s30 = sadd.s32 %s29, 1
      %p33 = scmp.eq.s32.totalorder %s21, 3
      %p34 = scmp.ne.s32.totalorder %s29, %s31
      %p35 = scmp.eq.s32.totalorder %s21, 0
      %p36 = por %p34, %p35
      %p37 = scmp.ne.s32.totalorder %s29, %s31
      %p38 = scmp.eq.s32.totalorder %s26, 3
      %p39 = por %p37, %p38
      %p40 = scmp.ne.s32.totalorder %s31, %s32
      %p41 = scmp.eq.s32.totalorder %s26, 0
      %p42 = por %p40, %p41
      %p43 = scmp.ne.s32.totalorder %s31, %s32
      %p44 = scmp.eq.s32.totalorder %s27, 3
      %p45 = por %p43, %p44
      %p47 = scmp.ne.s32.totalorder %s32, %s46
      %p48 = scmp.eq.s32.totalorder %s27, 0
      %p49 = por %p47, %p48
      %s50 = ssub.s32 %s21, %s28
      %p51 = scmp.eq.s32.totalorder %s50, 0
      %s53 = sadd.s32 %s52, 1
      %s54 = scalar_select %p51, %s52, %s53
      %p57 = pneg %p51
      %p58 = scmp.eq.s32.totalorder %s21, 3
      %p59 = por %p57, %p58
      %p60 = scmp.ne.s32.totalorder %s52, %s55
      %p61 = scmp.eq.s32.totalorder %s21, 0
      %p62 = por %p60, %p61
      %p63 = scmp.ne.s32.totalorder %s52, %s55
      %p64 = scmp.eq.s32.totalorder %s26, 3
      %p65 = por %p63, %p64
      %p66 = scmp.ne.s32.totalorder %s55, %s56
      %p67 = scmp.eq.s32.totalorder %s26, 0
      %p68 = por %p66, %p67
      %p69 = scmp.ne.s32.totalorder %s55, %s56
      %p70 = scmp.eq.s32.totalorder %s27, 3
      %p71 = por %p69, %p70
      %p73 = scmp.ne.s32.totalorder %s56, %s72
      %p74 = scmp.eq.s32.totalorder %s27, 0
      %p75 = por %p73, %p74
      %s77 = sadd.s32 %s76, 1
      %p80 = scmp.eq.s32.totalorder %s21, 3
      %p81 = scmp.ne.s32.totalorder %s76, %s78
      %p82 = scmp.eq.s32.totalorder %s21, 0
      %p83 = por %p81, %p82
      %p84 = scmp.ne.s32.totalorder %s76, %s78
      %p85 = scmp.eq.s32.totalorder %s26, 3
      %p86 = por %p84, %p85
      %p87 = scmp.ne.s32.totalorder %s78, %s79
      %p88 = scmp.eq.s32.totalorder %s26, 0
      %p89 = por %p87, %p88
      %p90 = scmp.ne.s32.totalorder %s78, %s79
      %p91 = scmp.eq.s32.totalorder %s27, 3
      %p92 = por %p90, %p91
      %p94 = scmp.ne.s32.totalorder %s79, %s93
      %p95 = scmp.eq.s32.totalorder %s27, 0
      %p96 = por %p94, %p95
      %s97 = ssub.s32 %s21, %s28
      %p98 = scmp.eq.s32.totalorder %s97, 0
      %s100 = sadd.s32 %s99, 1
      %s101 = scalar_select %p98, %s99, %s100
      %p104 = pneg %p98
      %p105 = scmp.eq.s32.totalorder %s21, 3
      %p106 = por %p104, %p105
      %p107 = scmp.ne.s32.totalorder %s99, %s102
      %p108 = scmp.eq.s32.totalorder %s21, 0
      %p109 = por %p107, %p108
      %p110 = scmp.ne.s32.totalorder %s99, %s102
      %p111 = scmp.eq.s32.totalorder %s26, 3
      %p112 = por %p110, %p111
      %p113 = scmp.ne.s32.totalorder %s102, %s103
      %p114 = scmp.eq.s32.totalorder %s26, 0
      %p115 = por %p113, %p114
      %p116 = scmp.ne.s32.totalorder %s102, %s103
      %p117 = scmp.eq.s32.totalorder %s27, 3
      %p118 = por %p116, %p117
      %p120 = scmp.ne.s32.totalorder %s103, %s119
      %p121 = scmp.eq.s32.totalorder %s27, 0
      %p122 = por %p120, %p121
      %s123 = ssub.s32 %s21, %s28
      %p124 = scmp.eq.s32.totalorder %s123, 0
      %s126 = sadd.s32 %s125, 1
      %s127 = scalar_select %p124, %s125, %s126
      %p130 = pneg %p124
      %p131 = scmp.eq.s32.totalorder %s21, 3
      %p132 = por %p130, %p131
      %p133 = scmp.ne.s32.totalorder %s125, %s128
      %p134 = scmp.eq.s32.totalorder %s21, 0
      %p135 = por %p133, %p134
      %p136 = scmp.ne.s32.totalorder %s125, %s128
      %p137 = scmp.eq.s32.totalorder %s26, 3
      %p138 = por %p136, %p137
      %p139 = scmp.ne.s32.totalorder %s128, %s129
      %p140 = scmp.eq.s32.totalorder %s26, 0
      %p141 = por %p139, %p140
      %p142 = scmp.ne.s32.totalorder %s128, %s129
      %p143 = scmp.eq.s32.totalorder %s27, 3
      %p144 = por %p142, %p143
      %p146 = scmp.ne.s32.totalorder %s129, %s145
      %p147 = scmp.eq.s32.totalorder %s27, 0
      %p148 = por %p146, %p147
      %s149 = ssub.s32 %s21, %s28
      %p150 = scmp.eq.s32.totalorder %s149, 0
      %s152 = sadd.s32 %s151, 1
      %s153 = scalar_select %p150, %s151, %s152
      %p156 = pneg %p150
      %p157 = scmp.eq.s32.totalorder %s21, 3
      %p158 = por %p156, %p157
      %p159 = scmp.ne.s32.totalorder %s151, %s154
      %p160 = scmp.eq.s32.totalorder %s21, 0
      %p161 = por %p159, %p160
      %p162 = scmp.ne.s32.totalorder %s151, %s154
      %p163 = scmp.eq.s32.totalorder %s26, 3
      %p164 = por %p162, %p163
      %p165 = scmp.ne.s32.totalorder %s154, %s155
      %p166 = scmp.eq.s32.totalorder %s26, 0
      %p167 = por %p165, %p166
      %p168 = scmp.ne.s32.totalorder %s154, %s155
      %p169 = scmp.eq.s32.totalorder %s27, 3
      %p170 = por %p168, %p169
      %p172 = scmp.ne.s32.totalorder %s155, %s171
      %p173 = scmp.eq.s32.totalorder %s27, 0
      %p174 = por %p172, %p173
      %s175 = ssub.s32 %s21, %s28
      %p176 = scmp.eq.s32.totalorder %s175, 0
      %s178 = sadd.s32 %s177, 1
      %s179 = scalar_select %p176, %s177, %s178
      %p182 = pneg %p176
      %p183 = scmp.eq.s32.totalorder %s21, 3
      %p184 = por %p182, %p183
      %p185 = scmp.ne.s32.totalorder %s177, %s180
      %p186 = scmp.eq.s32.totalorder %s21, 0
      %p187 = por %p185, %p186
      %p188 = scmp.ne.s32.totalorder %s177, %s180
      %p189 = scmp.eq.s32.totalorder %s26, 3
      %p190 = por %p188, %p189
      %p191 = scmp.ne.s32.totalorder %s180, %s181
      %p192 = scmp.eq.s32.totalorder %s26, 0
      %p193 = por %p191, %p192
      %p194 = scmp.ne.s32.totalorder %s180, %s181
      %p195 = scmp.eq.s32.totalorder %s27, 3
      %p196 = por %p194, %p195
      %p198 = scmp.ne.s32.totalorder %s181, %s197
      %p199 = scmp.eq.s32.totalorder %s27, 0
      %p200 = por %p198, %p199
      %s201 = ssub.s32 %s21, %s28
      %p202 = scmp.eq.s32.totalorder %s201, 0
      %s204 = sadd.s32 %s203, 1
      %s205 = scalar_select %p202, %s203, %s204
      %p208 = pneg %p202
      %p209 = scmp.eq.s32.totalorder %s21, 3
      %p210 = por %p208, %p209
      %p211 = scmp.ne.s32.totalorder %s203, %s206
      %p212 = scmp.eq.s32.totalorder %s21, 0
      %p213 = por %p211, %p212
      %p214 = scmp.ne.s32.totalorder %s203, %s206
      %p215 = scmp.eq.s32.totalorder %s26, 3
      %p216 = por %p214, %p215
      %p217 = scmp.ne.s32.totalorder %s206, %s207
      %p218 = scmp.eq.s32.totalorder %s26, 0
      %p219 = por %p217, %p218
      %p220 = scmp.ne.s32.totalorder %s206, %s207
      %p221 = scmp.eq.s32.totalorder %s27, 3
      %p222 = por %p220, %p221
      %p224 = scmp.ne.s32.totalorder %s207, %s223
      %p225 = scmp.eq.s32.totalorder %s27, 0
      %p226 = por %p224, %p225
      %p227 = scmp.le.s32.totalorder 1, %s21
      %p228 = scmp.lt.s32.totalorder %s21, 5
      %p229 = pnand %p227, %p228
      %p230 = pneg %p229
      // Predicated region
      $region9: #{tpu_custom_call.1} parent=5 // pred_check
        _
      $region10: #{tpu_custom_call.1} parent=5 // pred_check_branch
        %232 = sbr.rel (%p229) target = $region12
      $region11: #{tpu_custom_call.1} parent=5 // pred_region
        %s233 = ssub.s32 %s21, 1
        // Predicated region
        $region13: #{tpu_custom_call.1} parent=11 // pred_check
          %p234 = pneg %p42
        $region14: #{tpu_custom_call.1} parent=11 // pred_check_branch
          %236 = sbr.rel (%p234) target = $region16
        $region15: #{tpu_custom_call.1} parent=11 // pred_region
          %238 = vsyncadd [#allocation4], 0
          %s240 = sshll.u32 %s0, 4
          %s241 = int_to_ptr.vmem [resolvable:$true] %s240
          %243 = dma.vmem_to_smem %s241, 16, [#allocation2], [#allocation4]
        $region16: #{tpu_custom_call.1} parent=11 // pred_fallthru
          _
        // Predicated region
        $region17: #{tpu_custom_call.1} parent=11 // pred_check
          %p244 = pneg %p89
        $region18: #{tpu_custom_call.1} parent=11 // pred_check_branch
          %246 = sbr.rel (%p244) target = $region20
        $region19: #{tpu_custom_call.1} parent=11 // pred_region
          %248 = vsyncadd [#allocation3], 0
          %s249 = sshll.u32 %s2, 4
          %s250 = int_to_ptr.hbm [resolvable:$true] %s249
          %s251 = sshll.u32 [#allocation5], 4
          %s252 = int_to_ptr.vmem [resolvable:$true] %s251
          %257 = dma.hbm_to_vmem [thread:$0]  %s250, 512, %s252, [#allocation3], 256, 256, 16
        $region20: #{tpu_custom_call.1} parent=11 // pred_fallthru
          _
      $region12: #{tpu_custom_call.1} parent=5 // pred_fallthru
        _
      %p258 = scmp.lt.s32.totalorder %s21, 4
      // Predicated region
      $region21: #{tpu_custom_call.1} parent=5 // pred_check
        %p259 = pneg %p258
      $region22: #{tpu_custom_call.1} parent=5 // pred_check_branch
        %261 = sbr.rel (%p259) target = $region24
      $region23: #{tpu_custom_call.1} parent=5 // pred_region
        // Predicated region
        $region25: #{tpu_custom_call.1} parent=23 // pred_check
          %p262 = pneg %p62
        $region26: #{tpu_custom_call.1} parent=23 // pred_check_branch
          %264 = sbr.rel (%p262) target = $region28
        $region27: #{tpu_custom_call.1} parent=23 // pred_region
          %s265 = smul.u32 4, %s21
          %p266 = scmp.lt.s32.totalorder %s265, 15
          %s267 = scalar_select %p266, %s265, 15
          %s268 = smul.addr %s267, 8
          %s269 = scalar_lea.vmem %s1, %s268
          %s270 = smul.u32 4, %s21
        $region28: #{tpu_custom_call.1} parent=23 // pred_fallthru
          _
        // Predicated region
        $region29: #{tpu_custom_call.1} parent=23 // pred_check
          %p271 = pneg %p109
        $region30: #{tpu_custom_call.1} parent=23 // pred_check_branch
          %273 = sbr.rel (%p271) target = $region32
        $region31: #{tpu_custom_call.1} parent=23 // pred_region
          %s274 = smul.u32 4, %s21
          %p275 = scmp.lt.s32.totalorder %s274, 15
          %s276 = scalar_select %p275, %s274, 15
          %s277 = smul.addr %s276, 8
          %s278 = scalar_lea.vmem %s3, %s277
          %s279 = smul.u32 4, %s21
        $region32: #{tpu_custom_call.1} parent=23 // pred_fallthru
          _
        // Predicated region
        $region33: #{tpu_custom_call.1} parent=23 // pred_check
          %p280 = pneg %p135
        $region34: #{tpu_custom_call.1} parent=23 // pred_check_branch
          %282 = sbr.rel (%p280) target = $region36
        $region35: #{tpu_custom_call.1} parent=23 // pred_region
          %s283 = sand.u32 %s21, 1
          %s284 = scalar_lea.sflag [#allocation7], %s283
          %s285 = sand.u32 %s125, 1
          %s286 = smul.addr %s285, 32
          %s287 = scalar_lea.vmem [#allocation6], %s286
          %s288 = smul.u32 4, %s21
          %290 = vsyncadd %s284, 0
          %s291 = smul.addr %s288, 8
          %s292 = scalar_lea.hbm %s4, %s291
          %s293 = sshll.u32 %s292, 4
          %s294 = int_to_ptr.hbm [resolvable:$true] %s293
          %s295 = sshll.u32 %s287, 4
          %s296 = int_to_ptr.vmem [resolvable:$true] %s295
          %301 = dma.hbm_to_vmem [thread:$0]  %s294, 512, %s296, %s284, 128, 128, 8
        $region36: #{tpu_custom_call.1} parent=23 // pred_fallthru
          _
        // Predicated region
        $region37: #{tpu_custom_call.1} parent=23 // pred_check
          %p302 = pneg %p161
        $region38: #{tpu_custom_call.1} parent=23 // pred_check_branch
          %304 = sbr.rel (%p302) target = $region40
        $region39: #{tpu_custom_call.1} parent=23 // pred_region
          %s305 = sand.u32 %s21, 1
          %s306 = scalar_lea.sflag [#allocation7], %s305
          %s307 = sand.u32 %s151, 1
          %s308 = smul.addr %s307, 32
          %s309 = scalar_lea.vmem [#allocation8], %s308
          %s310 = smul.u32 4, %s21
          %312 = vsyncadd %s306, 0
          %s313 = smul.addr %s310, 8
          %s314 = scalar_lea.hbm %s5, %s313
          %s315 = sshll.u32 %s314, 4
          %s316 = int_to_ptr.hbm [resolvable:$true] %s315
          %s317 = sshll.u32 %s309, 4
          %s318 = int_to_ptr.vmem [resolvable:$true] %s317
          %323 = dma.hbm_to_vmem [thread:$0]  %s316, 512, %s318, %s306, 128, 128, 8
        $region40: #{tpu_custom_call.1} parent=23 // pred_fallthru
          _
        // Predicated region
        $region41: #{tpu_custom_call.1} parent=23 // pred_check
          %p324 = pneg %p187
        $region42: #{tpu_custom_call.1} parent=23 // pred_check_branch
          %326 = sbr.rel (%p324) target = $region44
        $region43: #{tpu_custom_call.1} parent=23 // pred_region
          %s327 = sand.u32 %s177, 1
          %s328 = scalar_lea.sflag [#allocation10], %s327
          %s329 = sand.u32 %s177, 1
          %s330 = smul.addr %s329, 32
          %s331 = scalar_lea.vmem [#allocation9], %s330
          %s332 = smul.u32 4, %s21
          %334 = vsyncadd %s328, 0
          %s335 = smul.addr %s332, 8
          %s336 = scalar_lea.hbm %s6, %s335
          %s337 = sshll.u32 %s336, 4
          %s338 = int_to_ptr.hbm [resolvable:$true] %s337
          %s339 = sshll.u32 %s331, 4
          %s340 = int_to_ptr.vmem [resolvable:$true] %s339
          %345 = dma.hbm_to_vmem [thread:$0]  %s338, 512, %s340, %s328, 128, 128, 8
        $region44: #{tpu_custom_call.1} parent=23 // pred_fallthru
          _
      $region24: #{tpu_custom_call.1} parent=5 // pred_fallthru
        _
      %p346 = scmp.le.s32.totalorder 1, %s21
      %p347 = scmp.lt.s32.totalorder %s21, 5
      %p348 = pnand %p346, %p347
      %p349 = pneg %p348
      // Predicated region
      $region45: #{tpu_custom_call.1} parent=5 // pred_check
        _
      $region46: #{tpu_custom_call.1} parent=5 // pred_check_branch
        %351 = sbr.rel (%p348) target = $region48
      $region47: #{tpu_custom_call.1} parent=5 // pred_region
        %s352 = ssub.s32 %s21, 1
        // Predicated region
        $region49: #{tpu_custom_call.1} parent=47 // pred_check
          %p353 = pneg %p42
        $region50: #{tpu_custom_call.1} parent=47 // pred_check_branch
          %355 = sbr.rel (%p353) target = $region52
        $region51: #{tpu_custom_call.1} parent=47 // pred_region
          %357 = dma.done [#allocation4], 16
        $region52: #{tpu_custom_call.1} parent=47 // pred_fallthru
          _
        // Predicated region
        $region53: #{tpu_custom_call.1} parent=47 // pred_check
          %p358 = pneg %p89
        $region54: #{tpu_custom_call.1} parent=47 // pred_check_branch
          %360 = sbr.rel (%p358) target = $region56
        $region55: #{tpu_custom_call.1} parent=47 // pred_region
          %362 = dma.done [#allocation3], 512
        $region56: #{tpu_custom_call.1} parent=47 // pred_fallthru
          _
        %s363 = sand.u32 %s26, 1
        %s364 = scalar_lea.sflag [#allocation7], %s363
        %s365 = sand.u32 %s128, 1
        %s366 = smul.addr %s365, 32
        %s367 = scalar_lea.vmem [#allocation6], %s366
        // Predicated region
        $region57: #{tpu_custom_call.1} parent=47 // pred_check
          %p368 = pneg %p141
        $region58: #{tpu_custom_call.1} parent=47 // pred_check_branch
          %370 = sbr.rel (%p368) target = $region60
        $region59: #{tpu_custom_call.1} parent=47 // pred_region
          %372 = dma.done %s364, 512
        $region60: #{tpu_custom_call.1} parent=47 // pred_fallthru
          _
        %s373 = sand.u32 %s26, 1
        %s374 = scalar_lea.sflag [#allocation7], %s373
        %s375 = sand.u32 %s154, 1
        %s376 = smul.addr %s375, 32
        %s377 = scalar_lea.vmem [#allocation8], %s376
        // Predicated region
        $region61: #{tpu_custom_call.1} parent=47 // pred_check
          %p378 = pneg %p167
        $region62: #{tpu_custom_call.1} parent=47 // pred_check_branch
          %380 = sbr.rel (%p378) target = $region64
        $region63: #{tpu_custom_call.1} parent=47 // pred_region
          %382 = dma.done %s374, 512
        $region64: #{tpu_custom_call.1} parent=47 // pred_fallthru
          _
        %s383 = sand.u32 %s180, 1
        %s384 = scalar_lea.sflag [#allocation10], %s383
        %s385 = sand.u32 %s180, 1
        %s386 = smul.addr %s385, 32
        %s387 = scalar_lea.vmem [#allocation9], %s386
        // Predicated region
        $region65: #{tpu_custom_call.1} parent=47 // pred_check
          %p388 = pneg %p193
        $region66: #{tpu_custom_call.1} parent=47 // pred_check_branch
          %390 = sbr.rel (%p388) target = $region68
        $region67: #{tpu_custom_call.1} parent=47 // pred_region
          %392 = dma.done %s384, 512
        $region68: #{tpu_custom_call.1} parent=47 // pred_fallthru
          _
        %393 = sfence
        %p394 = pneg %p42
        %p395 = pneg %p39
        %s396 = smul.u32 4, %s26
        %p397 = scmp.lt.s32.totalorder %s396, 15
        %s398 = scalar_select %p397, %s396, 15
        %s399 = smul.addr %s398, 8
        %s400 = scalar_lea.vmem %s1, %s399
        %p401 = pneg %p68
        %p402 = pneg %p65
        %p403 = pneg %p89
        %p404 = pneg %p86
        %s405 = smul.u32 4, %s26
        %p406 = scmp.lt.s32.totalorder %s405, 15
        %s407 = scalar_select %p406, %s405, 15
        %s408 = smul.addr %s407, 8
        %s409 = scalar_lea.vmem %s3, %s408
        %p410 = pneg %p115
        %p411 = pneg %p112
        %s412 = sand.u32 %s26, 1
        %s413 = scalar_lea.sflag [#allocation7], %s412
        %s414 = sand.u32 %s128, 1
        %s415 = smul.addr %s414, 32
        %s416 = scalar_lea.vmem [#allocation6], %s415
        %p417 = pneg %p141
        %p418 = pneg %p138
        %s419 = sand.u32 %s26, 1
        %s420 = scalar_lea.sflag [#allocation7], %s419
        %s421 = sand.u32 %s154, 1
        %s422 = smul.addr %s421, 32
        %s423 = scalar_lea.vmem [#allocation8], %s422
        %p424 = pneg %p167
        %p425 = pneg %p164
        %s426 = sand.u32 %s180, 1
        %s427 = scalar_lea.sflag [#allocation10], %s426
        %s428 = sand.u32 %s180, 1
        %s429 = smul.addr %s428, 32
        %s430 = scalar_lea.vmem [#allocation9], %s429
        %p431 = pneg %p193
        %p432 = pneg %p190
        %p433 = pneg %p219
        %p434 = pneg %p216
        %s435 = smul.u32 4, %s26
        %p436 = scmp.lt.s32.totalorder %s435, 15
        %s437 = scalar_select %p436, %s435, 15
        %s438 = smul.addr %s437, 8
        %s439 = scalar_lea.vmem %s7, %s438
        %s440 = smul.u32 4, %s26
        %p441 = scmp.lt.s32.totalorder %s440, 15
        %s442 = scalar_select %p441, %s440, 15
        %s443 = smul.addr %s442, 8
        %s444 = scalar_lea.vmem %s1, %s443
        %s445 = smul.u32 4, %s26
        %s446 = smul.u32 4, %s26
        %p447 = scmp.lt.s32.totalorder %s446, 15
        %s448 = scalar_select %p447, %s446, 15
        %s449 = smul.addr %s448, 8
        %s450 = scalar_lea.vmem %s3, %s449
        %s451 = smul.u32 4, %s26
        %s452 = smul.u32 4, %s26
        %s453 = smul.u32 4, %s26
        %s454 = smul.u32 4, %s26
        %s455 = smul.u32 4, %s26
        %p456 = scmp.lt.s32.totalorder %s455, 15
        %s457 = scalar_select %p456, %s455, 15
        %s458 = smul.addr %s457, 8
        %s459 = scalar_lea.vmem %s7, %s458
        %s460 = smul.u32 4, %s26
        %v461 = vld [vmem:[%s444] sm:$0xff]
        %v462 = vld [vmem:[%s444 + $0x8] sm:$0xff]
        %v463 = vld [vmem:[%s444 + $0x10] sm:$0xff]
        %v464 = vld [vmem:[%s444 + $0x18] sm:$0xff]
        %v465 = vlaneseq
        %v466 = vand.u32 %v465, 127
        %467 = vset.pattern.permute.xlu0 0
        %468 = vperm.xlu0 %467, %v461
        %v469 = vpop.permute.xlu0 %468
        %470 = vset.pattern.permute.xlu0 0
        %471 = vperm.xlu0 %470, %v462
        %v472 = vpop.permute.xlu0 %471
        %473 = vset.pattern.permute.xlu0 0
        %474 = vperm.xlu0 %473, %v463
        %v475 = vpop.permute.xlu0 %474
        %476 = vset.pattern.permute.xlu0 0
        %477 = vperm.xlu0 %476, %v464
        %v478 = vpop.permute.xlu0 %477
        %vm479 = vcmp.eq.s32.totalorder %v466, %v469
        %vm480 = vcmp.eq.s32.totalorder %v466, %v472
        %vm481 = vcmp.eq.s32.totalorder %v466, %v475
        %vm482 = vcmp.eq.s32.totalorder %v466, %v478
        %v483 = vsel %vm479, 1, 0
        %v484 = vsel %vm480, 1, 0
        %v485 = vsel %vm481, 1, 0
        %v486 = vsel %vm482, 1, 0
        %v487 = vcvt.s32.f32 %v483
        %v488 = vcvt.s32.f32 %v484
        %v489 = vcvt.s32.f32 %v485
        %v490 = vcvt.s32.f32 %v486
        %v491 = vld [vmem:[#allocation5] sm:$0xff]
        %v492 = vld [vmem:[#allocation5 + $0x8] sm:$0xff]
        %v493 = vld [vmem:[#allocation5 + $0x10] sm:$0xff]
        %v494 = vld [vmem:[#allocation5 + $0x18] sm:$0xff]
        %vm495 = vcmask 130048
        %v497 = vsel %vm495, %v487, 0
        %v500 = vsel %vm495, %v488, 0
        %v503 = vsel %vm495, %v489, 0
        %v506 = vsel %vm495, %v490, 0
        %508 = vmatpush.msra.mxu0 0.0
        %509 = vmatpush.msra.mxu0 0.0
        %510 = vmatpush.msra.mxu0 0.0
        %511 = vmatpush.msra.mxu0 0.0
        %512 = vmatpush.msra.mxu0 0.0
        %513 = vmatpush.msra.mxu0 0.0
        %514 = vmatpush.msra.mxu0 0.0
        %515 = vmatpush.msra.mxu0 0.0
        %516 = vmatpush.msra.mxu0 0.0
        %517 = vmatpush.msra.mxu0 0.0
        %518 = vmatpush.msra.mxu0 0.0
        %519 = vmatpush.msra.mxu0 0.0
        %520 = vmatpush.msra.mxu0 0.0
        %521 = vmatpush.msra.mxu0 0.0
        %v522 = vand.u32 %v493, 4294901760
        %523 = vmatpush.msra.mxu0 %v522
        %v524 = vand.u32 %v491, 4294901760
        %525 = vmatpush.msra.mxu0 %v524
        %v526 = vand.u32 %v497, 4294901760
        %v527 = vsub.f32 %v497, %v526
        %v528 = vand.u32 %v527, 4294901760
        %v529 = vsub.f32 %v527, %v528
        %v530 = vand.u32 %v529, 4294901760
        %531 = vmatmul.f32.gmra.mxu0 %v530
        %v532 = vpop.f32.mrf.mxu0
        %v533 = vadd.f32 0.0, %v532
        %v534 = vand.u32 %v500, 4294901760
        %v535 = vsub.f32 %v500, %v534
        %v536 = vand.u32 %v535, 4294901760
        %v537 = vsub.f32 %v535, %v536
        %v538 = vand.u32 %v537, 4294901760
        %539 = vmatmul.f32.gmra.mxu0 %v538
        %v540 = vpop.f32.mrf.mxu0
        %v541 = vadd.f32 0.0, %v540
        %v542 = vand.u32 %v503, 4294901760
        %v543 = vsub.f32 %v503, %v542
        %v544 = vand.u32 %v543, 4294901760
        %v545 = vsub.f32 %v543, %v544
        %v546 = vand.u32 %v545, 4294901760
        %547 = vmatmul.f32.gmra.mxu0 %v546
        %v548 = vpop.f32.mrf.mxu0
        %v549 = vadd.f32 0.0, %v548
        %v550 = vand.u32 %v506, 4294901760
        %v551 = vsub.f32 %v506, %v550
        %v552 = vand.u32 %v551, 4294901760
        %v553 = vsub.f32 %v551, %v552
        %v554 = vand.u32 %v553, 4294901760
        %555 = vmatmul.f32.gmra.mxu0 %v554
        %v556 = vpop.f32.mrf.mxu0
        %v557 = vadd.f32 0.0, %v556
        %558 = vdwg.mxu0
        %559 = vmatpush.msra.mxu0 0.0
        %560 = vmatpush.msra.mxu0 0.0
        %561 = vmatpush.msra.mxu0 0.0
        %562 = vmatpush.msra.mxu0 0.0
        %563 = vmatpush.msra.mxu0 0.0
        %564 = vmatpush.msra.mxu0 0.0
        %565 = vmatpush.msra.mxu0 0.0
        %566 = vmatpush.msra.mxu0 0.0
        %567 = vmatpush.msra.mxu0 0.0
        %568 = vmatpush.msra.mxu0 0.0
        %569 = vmatpush.msra.mxu0 0.0
        %570 = vmatpush.msra.mxu0 0.0
        %571 = vmatpush.msra.mxu0 0.0
        %572 = vmatpush.msra.mxu0 0.0
        %v573 = vand.u32 %v493, 4294901760
        %v574 = vsub.f32 %v493, %v573
        %v575 = vand.u32 %v574, 4294901760
        %v576 = vsub.f32 %v574, %v575
        %v577 = vand.u32 %v576, 4294901760
        %578 = vmatpush.msra.mxu0 %v577
        %v579 = vand.u32 %v491, 4294901760
        %v580 = vsub.f32 %v491, %v579
        %v581 = vand.u32 %v580, 4294901760
        %v582 = vsub.f32 %v580, %v581
        %v583 = vand.u32 %v582, 4294901760
        %584 = vmatpush.msra.mxu0 %v583
        %v585 = vand.u32 %v497, 4294901760
        %586 = vmatmul.f32.gmra.mxu0 %v585
        %v587 = vpop.f32.mrf.mxu0
        %v588 = vadd.f32 %v533, %v587
        %v589 = vand.u32 %v500, 4294901760
        %590 = vmatmul.f32.gmra.mxu0 %v589
        %v591 = vpop.f32.mrf.mxu0
        %v592 = vadd.f32 %v541, %v591
        %v593 = vand.u32 %v503, 4294901760
        %594 = vmatmul.f32.gmra.mxu0 %v593
        %v595 = vpop.f32.mrf.mxu0
        %v596 = vadd.f32 %v549, %v595
        %v597 = vand.u32 %v506, 4294901760
        %598 = vmatmul.f32.gmra.mxu0 %v597
        %v599 = vpop.f32.mrf.mxu0
        %v600 = vadd.f32 %v557, %v599
        %601 = vdwg.mxu0
        %602 = vmatpush.msra.mxu0 0.0
        %603 = vmatpush.msra.mxu0 0.0
        %604 = vmatpush.msra.mxu0 0.0
        %605 = vmatpush.msra.mxu0 0.0
        %606 = vmatpush.msra.mxu0 0.0
        %607 = vmatpush.msra.mxu0 0.0
        %608 = vmatpush.msra.mxu0 0.0
        %609 = vmatpush.msra.mxu0 0.0
        %610 = vmatpush.msra.mxu0 0.0
        %611 = vmatpush.msra.mxu0 0.0
        %612 = vmatpush.msra.mxu0 0.0
        %613 = vmatpush.msra.mxu0 0.0
        %614 = vmatpush.msra.mxu0 0.0
        %615 = vmatpush.msra.mxu0 0.0
        %v616 = vand.u32 %v493, 4294901760
        %v617 = vsub.f32 %v493, %v616
        %618 = vmatpush.msra.mxu0 %v617
        %v619 = vand.u32 %v491, 4294901760
        %v620 = vsub.f32 %v491, %v619
        %621 = vmatpush.msra.mxu0 %v620
        %v622 = vand.u32 %v497, 4294901760
        %v623 = vsub.f32 %v497, %v622
        %624 = vmatmul.f32.gmra.mxu0 %v623
        %v625 = vpop.f32.mrf.mxu0
        %v626 = vadd.f32 %v588, %v625
        %v627 = vand.u32 %v500, 4294901760
        %v628 = vsub.f32 %v500, %v627
        %629 = vmatmul.f32.gmra.mxu0 %v628
        %v630 = vpop.f32.mrf.mxu0
        %v631 = vadd.f32 %v592, %v630
        %v632 = vand.u32 %v503, 4294901760
        %v633 = vsub.f32 %v503, %v632
        %634 = vmatmul.f32.gmra.mxu0 %v633
        %v635 = vpop.f32.mrf.mxu0
        %v636 = vadd.f32 %v596, %v635
        %v637 = vand.u32 %v506, 4294901760
        %v638 = vsub.f32 %v506, %v637
        %639 = vmatmul.f32.gmra.mxu0 %v638
        %v640 = vpop.f32.mrf.mxu0
        %v641 = vadd.f32 %v600, %v640
        %642 = vdwg.mxu0
        %643 = vmatpush.msra.mxu0 0.0
        %644 = vmatpush.msra.mxu0 0.0
        %645 = vmatpush.msra.mxu0 0.0
        %646 = vmatpush.msra.mxu0 0.0
        %647 = vmatpush.msra.mxu0 0.0
        %648 = vmatpush.msra.mxu0 0.0
        %649 = vmatpush.msra.mxu0 0.0
        %650 = vmatpush.msra.mxu0 0.0
        %651 = vmatpush.msra.mxu0 0.0
        %652 = vmatpush.msra.mxu0 0.0
        %653 = vmatpush.msra.mxu0 0.0
        %654 = vmatpush.msra.mxu0 0.0
        %655 = vmatpush.msra.mxu0 0.0
        %656 = vmatpush.msra.mxu0 0.0
        %v657 = vand.u32 %v493, 4294901760
        %658 = vmatpush.msra.mxu0 %v657
        %v659 = vand.u32 %v491, 4294901760
        %660 = vmatpush.msra.mxu0 %v659
        %v661 = vand.u32 %v497, 4294901760
        %v662 = vsub.f32 %v497, %v661
        %v663 = vand.u32 %v662, 4294901760
        %664 = vmatmul.f32.gmra.mxu0 %v663
        %v665 = vpop.f32.mrf.mxu0
        %v666 = vadd.f32 %v626, %v665
        %v667 = vand.u32 %v500, 4294901760
        %v668 = vsub.f32 %v500, %v667
        %v669 = vand.u32 %v668, 4294901760
        %670 = vmatmul.f32.gmra.mxu0 %v669
        %v671 = vpop.f32.mrf.mxu0
        %v672 = vadd.f32 %v631, %v671
        %v673 = vand.u32 %v503, 4294901760
        %v674 = vsub.f32 %v503, %v673
        %v675 = vand.u32 %v674, 4294901760
        %676 = vmatmul.f32.gmra.mxu0 %v675
        %v677 = vpop.f32.mrf.mxu0
        %v678 = vadd.f32 %v636, %v677
        %v679 = vand.u32 %v506, 4294901760
        %v680 = vsub.f32 %v506, %v679
        %v681 = vand.u32 %v680, 4294901760
        %682 = vmatmul.f32.gmra.mxu0 %v681
        %v683 = vpop.f32.mrf.mxu0
        %v684 = vadd.f32 %v641, %v683
        %685 = vdwg.mxu0
        %686 = vmatpush.msra.mxu0 0.0
        %687 = vmatpush.msra.mxu0 0.0
        %688 = vmatpush.msra.mxu0 0.0
        %689 = vmatpush.msra.mxu0 0.0
        %690 = vmatpush.msra.mxu0 0.0
        %691 = vmatpush.msra.mxu0 0.0
        %692 = vmatpush.msra.mxu0 0.0
        %693 = vmatpush.msra.mxu0 0.0
        %694 = vmatpush.msra.mxu0 0.0
        %695 = vmatpush.msra.mxu0 0.0
        %696 = vmatpush.msra.mxu0 0.0
        %697 = vmatpush.msra.mxu0 0.0
        %698 = vmatpush.msra.mxu0 0.0
        %699 = vmatpush.msra.mxu0 0.0
        %v700 = vand.u32 %v493, 4294901760
        %v701 = vsub.f32 %v493, %v700
        %v702 = vand.u32 %v701, 4294901760
        %703 = vmatpush.msra.mxu0 %v702
        %v704 = vand.u32 %v491, 4294901760
        %v705 = vsub.f32 %v491, %v704
        %v706 = vand.u32 %v705, 4294901760
        %707 = vmatpush.msra.mxu0 %v706
        %v708 = vand.u32 %v497, 4294901760
        %709 = vmatmul.f32.gmra.mxu0 %v708
        %v710 = vpop.f32.mrf.mxu0
        %v711 = vadd.f32 %v666, %v710
        %v712 = vand.u32 %v500, 4294901760
        %713 = vmatmul.f32.gmra.mxu0 %v712
        %v714 = vpop.f32.mrf.mxu0
        %v715 = vadd.f32 %v672, %v714
        %v716 = vand.u32 %v503, 4294901760
        %717 = vmatmul.f32.gmra.mxu0 %v716
        %v718 = vpop.f32.mrf.mxu0
        %v719 = vadd.f32 %v678, %v718
        %v720 = vand.u32 %v506, 4294901760
        %721 = vmatmul.f32.gmra.mxu0 %v720
        %v722 = vpop.f32.mrf.mxu0
        %v723 = vadd.f32 %v684, %v722
        %724 = vdwg.mxu0
        %725 = vmatpush.msra.mxu0 0.0
        %726 = vmatpush.msra.mxu0 0.0
        %727 = vmatpush.msra.mxu0 0.0
        %728 = vmatpush.msra.mxu0 0.0
        %729 = vmatpush.msra.mxu0 0.0
        %730 = vmatpush.msra.mxu0 0.0
        %731 = vmatpush.msra.mxu0 0.0
        %732 = vmatpush.msra.mxu0 0.0
        %733 = vmatpush.msra.mxu0 0.0
        %734 = vmatpush.msra.mxu0 0.0
        %735 = vmatpush.msra.mxu0 0.0
        %736 = vmatpush.msra.mxu0 0.0
        %737 = vmatpush.msra.mxu0 0.0
        %738 = vmatpush.msra.mxu0 0.0
        %v739 = vand.u32 %v493, 4294901760
        %740 = vmatpush.msra.mxu0 %v739
        %v741 = vand.u32 %v491, 4294901760
        %742 = vmatpush.msra.mxu0 %v741
        %v743 = vand.u32 %v497, 4294901760
        %744 = vmatmul.f32.gmra.mxu0 %v743
        %v745 = vpop.f32.mrf.mxu0
        %v746 = vadd.f32 %v711, %v745
        %v747 = vand.u32 %v500, 4294901760
        %748 = vmatmul.f32.gmra.mxu0 %v747
        %v749 = vpop.f32.mrf.mxu0
        %v750 = vadd.f32 %v715, %v749
        %v751 = vand.u32 %v503, 4294901760
        %752 = vmatmul.f32.gmra.mxu0 %v751
        %v753 = vpop.f32.mrf.mxu0
        %v754 = vadd.f32 %v719, %v753
        %v755 = vand.u32 %v506, 4294901760
        %756 = vmatmul.f32.gmra.mxu0 %v755
        %v757 = vpop.f32.mrf.mxu0
        %v758 = vadd.f32 %v723, %v757
        %759 = vdwg.mxu0
        %760 = vmatpush.msra.mxu0 0.0
        %761 = vmatpush.msra.mxu0 0.0
        %762 = vmatpush.msra.mxu0 0.0
        %763 = vmatpush.msra.mxu0 0.0
        %764 = vmatpush.msra.mxu0 0.0
        %765 = vmatpush.msra.mxu0 0.0
        %766 = vmatpush.msra.mxu0 0.0
        %767 = vmatpush.msra.mxu0 0.0
        %768 = vmatpush.msra.mxu0 0.0
        %769 = vmatpush.msra.mxu0 0.0
        %770 = vmatpush.msra.mxu0 0.0
        %771 = vmatpush.msra.mxu0 0.0
        %772 = vmatpush.msra.mxu0 0.0
        %773 = vmatpush.msra.mxu0 0.0
        %v774 = vand.u32 %v494, 4294901760
        %775 = vmatpush.msra.mxu0 %v774
        %v776 = vand.u32 %v492, 4294901760
        %777 = vmatpush.msra.mxu0 %v776
        %v778 = vand.u32 %v497, 4294901760
        %v779 = vsub.f32 %v497, %v778
        %v780 = vand.u32 %v779, 4294901760
        %v781 = vsub.f32 %v779, %v780
        %v782 = vand.u32 %v781, 4294901760
        %783 = vmatmul.f32.gmra.mxu0 %v782
        %v784 = vpop.f32.mrf.mxu0
        %v785 = vadd.f32 0.0, %v784
        %v786 = vand.u32 %v500, 4294901760
        %v787 = vsub.f32 %v500, %v786
        %v788 = vand.u32 %v787, 4294901760
        %v789 = vsub.f32 %v787, %v788
        %v790 = vand.u32 %v789, 4294901760
        %791 = vmatmul.f32.gmra.mxu0 %v790
        %v792 = vpop.f32.mrf.mxu0
        %v793 = vadd.f32 0.0, %v792
        %v794 = vand.u32 %v503, 4294901760
        %v795 = vsub.f32 %v503, %v794
        %v796 = vand.u32 %v795, 4294901760
        %v797 = vsub.f32 %v795, %v796
        %v798 = vand.u32 %v797, 4294901760
        %799 = vmatmul.f32.gmra.mxu0 %v798
        %v800 = vpop.f32.mrf.mxu0
        %v801 = vadd.f32 0.0, %v800
        %v802 = vand.u32 %v506, 4294901760
        %v803 = vsub.f32 %v506, %v802
        %v804 = vand.u32 %v803, 4294901760
        %v805 = vsub.f32 %v803, %v804
        %v806 = vand.u32 %v805, 4294901760
        %807 = vmatmul.f32.gmra.mxu0 %v806
        %v808 = vpop.f32.mrf.mxu0
        %v809 = vadd.f32 0.0, %v808
        %810 = vdwg.mxu0
        %811 = vmatpush.msra.mxu0 0.0
        %812 = vmatpush.msra.mxu0 0.0
        %813 = vmatpush.msra.mxu0 0.0
        %814 = vmatpush.msra.mxu0 0.0
        %815 = vmatpush.msra.mxu0 0.0
        %816 = vmatpush.msra.mxu0 0.0
        %817 = vmatpush.msra.mxu0 0.0
        %818 = vmatpush.msra.mxu0 0.0
        %819 = vmatpush.msra.mxu0 0.0
        %820 = vmatpush.msra.mxu0 0.0
        %821 = vmatpush.msra.mxu0 0.0
        %822 = vmatpush.msra.mxu0 0.0
        %823 = vmatpush.msra.mxu0 0.0
        %824 = vmatpush.msra.mxu0 0.0
        %v825 = vand.u32 %v494, 4294901760
        %v826 = vsub.f32 %v494, %v825
        %v827 = vand.u32 %v826, 4294901760
        %v828 = vsub.f32 %v826, %v827
        %v829 = vand.u32 %v828, 4294901760
        %830 = vmatpush.msra.mxu0 %v829
        %v831 = vand.u32 %v492, 4294901760
        %v832 = vsub.f32 %v492, %v831
        %v833 = vand.u32 %v832, 4294901760
        %v834 = vsub.f32 %v832, %v833
        %v835 = vand.u32 %v834, 4294901760
        %836 = vmatpush.msra.mxu0 %v835
        %v837 = vand.u32 %v497, 4294901760
        %838 = vmatmul.f32.gmra.mxu0 %v837
        %v839 = vpop.f32.mrf.mxu0
        %v840 = vadd.f32 %v785, %v839
        %v841 = vand.u32 %v500, 4294901760
        %842 = vmatmul.f32.gmra.mxu0 %v841
        %v843 = vpop.f32.mrf.mxu0
        %v844 = vadd.f32 %v793, %v843
        %v845 = vand.u32 %v503, 4294901760
        %846 = vmatmul.f32.gmra.mxu0 %v845
        %v847 = vpop.f32.mrf.mxu0
        %v848 = vadd.f32 %v801, %v847
        %v849 = vand.u32 %v506, 4294901760
        %850 = vmatmul.f32.gmra.mxu0 %v849
        %v851 = vpop.f32.mrf.mxu0
        %v852 = vadd.f32 %v809, %v851
        %853 = vdwg.mxu0
        %854 = vmatpush.msra.mxu0 0.0
        %855 = vmatpush.msra.mxu0 0.0
        %856 = vmatpush.msra.mxu0 0.0
        %857 = vmatpush.msra.mxu0 0.0
        %858 = vmatpush.msra.mxu0 0.0
        %859 = vmatpush.msra.mxu0 0.0
        %860 = vmatpush.msra.mxu0 0.0
        %861 = vmatpush.msra.mxu0 0.0
        %862 = vmatpush.msra.mxu0 0.0
        %863 = vmatpush.msra.mxu0 0.0
        %864 = vmatpush.msra.mxu0 0.0
        %865 = vmatpush.msra.mxu0 0.0
        %866 = vmatpush.msra.mxu0 0.0
        %867 = vmatpush.msra.mxu0 0.0
        %v868 = vand.u32 %v494, 4294901760
        %v869 = vsub.f32 %v494, %v868
        %870 = vmatpush.msra.mxu0 %v869
        %v871 = vand.u32 %v492, 4294901760
        %v872 = vsub.f32 %v492, %v871
        %873 = vmatpush.msra.mxu0 %v872
        %v874 = vand.u32 %v497, 4294901760
        %v875 = vsub.f32 %v497, %v874
        %876 = vmatmul.f32.gmra.mxu0 %v875
        %v877 = vpop.f32.mrf.mxu0
        %v878 = vadd.f32 %v840, %v877
        %v879 = vand.u32 %v500, 4294901760
        %v880 = vsub.f32 %v500, %v879
        %881 = vmatmul.f32.gmra.mxu0 %v880
        %v882 = vpop.f32.mrf.mxu0
        %v883 = vadd.f32 %v844, %v882
        %v884 = vand.u32 %v503, 4294901760
        %v885 = vsub.f32 %v503, %v884
        %886 = vmatmul.f32.gmra.mxu0 %v885
        %v887 = vpop.f32.mrf.mxu0
        %v888 = vadd.f32 %v848, %v887
        %v889 = vand.u32 %v506, 4294901760
        %v890 = vsub.f32 %v506, %v889
        %891 = vmatmul.f32.gmra.mxu0 %v890
        %v892 = vpop.f32.mrf.mxu0
        %v893 = vadd.f32 %v852, %v892
        %894 = vdwg.mxu0
        %895 = vmatpush.msra.mxu0 0.0
        %896 = vmatpush.msra.mxu0 0.0
        %897 = vmatpush.msra.mxu0 0.0
        %898 = vmatpush.msra.mxu0 0.0
        %899 = vmatpush.msra.mxu0 0.0
        %900 = vmatpush.msra.mxu0 0.0
        %901 = vmatpush.msra.mxu0 0.0
        %902 = vmatpush.msra.mxu0 0.0
        %903 = vmatpush.msra.mxu0 0.0
        %904 = vmatpush.msra.mxu0 0.0
        %905 = vmatpush.msra.mxu0 0.0
        %906 = vmatpush.msra.mxu0 0.0
        %907 = vmatpush.msra.mxu0 0.0
        %908 = vmatpush.msra.mxu0 0.0
        %v909 = vand.u32 %v494, 4294901760
        %910 = vmatpush.msra.mxu0 %v909
        %v911 = vand.u32 %v492, 4294901760
        %912 = vmatpush.msra.mxu0 %v911
        %v913 = vand.u32 %v497, 4294901760
        %v914 = vsub.f32 %v497, %v913
        %v915 = vand.u32 %v914, 4294901760
        %916 = vmatmul.f32.gmra.mxu0 %v915
        %v917 = vpop.f32.mrf.mxu0
        %v918 = vadd.f32 %v878, %v917
        %v919 = vand.u32 %v500, 4294901760
        %v920 = vsub.f32 %v500, %v919
        %v921 = vand.u32 %v920, 4294901760
        %922 = vmatmul.f32.gmra.mxu0 %v921
        %v923 = vpop.f32.mrf.mxu0
        %v924 = vadd.f32 %v883, %v923
        %v925 = vand.u32 %v503, 4294901760
        %v926 = vsub.f32 %v503, %v925
        %v927 = vand.u32 %v926, 4294901760
        %928 = vmatmul.f32.gmra.mxu0 %v927
        %v929 = vpop.f32.mrf.mxu0
        %v930 = vadd.f32 %v888, %v929
        %v931 = vand.u32 %v506, 4294901760
        %v932 = vsub.f32 %v506, %v931
        %v933 = vand.u32 %v932, 4294901760
        %934 = vmatmul.f32.gmra.mxu0 %v933
        %v935 = vpop.f32.mrf.mxu0
        %v936 = vadd.f32 %v893, %v935
        %937 = vdwg.mxu0
        %938 = vmatpush.msra.mxu0 0.0
        %939 = vmatpush.msra.mxu0 0.0
        %940 = vmatpush.msra.mxu0 0.0
        %941 = vmatpush.msra.mxu0 0.0
        %942 = vmatpush.msra.mxu0 0.0
        %943 = vmatpush.msra.mxu0 0.0
        %944 = vmatpush.msra.mxu0 0.0
        %945 = vmatpush.msra.mxu0 0.0
        %946 = vmatpush.msra.mxu0 0.0
        %947 = vmatpush.msra.mxu0 0.0
        %948 = vmatpush.msra.mxu0 0.0
        %949 = vmatpush.msra.mxu0 0.0
        %950 = vmatpush.msra.mxu0 0.0
        %951 = vmatpush.msra.mxu0 0.0
        %v952 = vand.u32 %v494, 4294901760
        %v953 = vsub.f32 %v494, %v952
        %v954 = vand.u32 %v953, 4294901760
        %955 = vmatpush.msra.mxu0 %v954
        %v956 = vand.u32 %v492, 4294901760
        %v957 = vsub.f32 %v492, %v956
        %v958 = vand.u32 %v957, 4294901760
        %959 = vmatpush.msra.mxu0 %v958
        %v960 = vand.u32 %v497, 4294901760
        %961 = vmatmul.f32.gmra.mxu0 %v960
        %v962 = vpop.f32.mrf.mxu0
        %v963 = vadd.f32 %v918, %v962
        %v964 = vand.u32 %v500, 4294901760
        %965 = vmatmul.f32.gmra.mxu0 %v964
        %v966 = vpop.f32.mrf.mxu0
        %v967 = vadd.f32 %v924, %v966
        %v968 = vand.u32 %v503, 4294901760
        %969 = vmatmul.f32.gmra.mxu0 %v968
        %v970 = vpop.f32.mrf.mxu0
        %v971 = vadd.f32 %v930, %v970
        %v972 = vand.u32 %v506, 4294901760
        %973 = vmatmul.f32.gmra.mxu0 %v972
        %v974 = vpop.f32.mrf.mxu0
        %v975 = vadd.f32 %v936, %v974
        %976 = vdwg.mxu0
        %977 = vmatpush.msra.mxu0 0.0
        %978 = vmatpush.msra.mxu0 0.0
        %979 = vmatpush.msra.mxu0 0.0
        %980 = vmatpush.msra.mxu0 0.0
        %981 = vmatpush.msra.mxu0 0.0
        %982 = vmatpush.msra.mxu0 0.0
        %983 = vmatpush.msra.mxu0 0.0
        %984 = vmatpush.msra.mxu0 0.0
        %985 = vmatpush.msra.mxu0 0.0
        %986 = vmatpush.msra.mxu0 0.0
        %987 = vmatpush.msra.mxu0 0.0
        %988 = vmatpush.msra.mxu0 0.0
        %989 = vmatpush.msra.mxu0 0.0
        %990 = vmatpush.msra.mxu0 0.0
        %v991 = vand.u32 %v494, 4294901760
        %992 = vmatpush.msra.mxu0 %v991
        %v993 = vand.u32 %v492, 4294901760
        %994 = vmatpush.msra.mxu0 %v993
        %v995 = vand.u32 %v497, 4294901760
        %996 = vmatmul.f32.gmra.mxu0 %v995
        %v997 = vpop.f32.mrf.mxu0
        %v998 = vadd.f32 %v963, %v997
        %v999 = vand.u32 %v500, 4294901760
        %1000 = vmatmul.f32.gmra.mxu0 %v999
        %v1001 = vpop.f32.mrf.mxu0
        %v1002 = vadd.f32 %v967, %v1001
        %v1003 = vand.u32 %v503, 4294901760
        %1004 = vmatmul.f32.gmra.mxu0 %v1003
        %v1005 = vpop.f32.mrf.mxu0
        %v1006 = vadd.f32 %v971, %v1005
        %v1007 = vand.u32 %v506, 4294901760
        %1008 = vmatmul.f32.gmra.mxu0 %v1007
        %v1009 = vpop.f32.mrf.mxu0
        %v1010 = vadd.f32 %v975, %v1009
        %1011 = vdwg.mxu0
        %v1012 = vld [vmem:[%s450] sm:$0xff]
        %v1013 = vld [vmem:[%s450 + $0x8] sm:$0xff]
        %v1014 = vld [vmem:[%s450 + $0x10] sm:$0xff]
        %v1015 = vld [vmem:[%s450 + $0x18] sm:$0xff]
        %v1016 = vld [vmem:[%s367] sm:$0xff]
        %v1017 = vld [vmem:[%s367 + $0x8] sm:$0xff]
        %v1018 = vld [vmem:[%s367 + $0x10] sm:$0xff]
        %v1019 = vld [vmem:[%s367 + $0x18] sm:$0xff]
        %v1020 = vld [vmem:[%s377] sm:$0xff]
        %v1021 = vld [vmem:[%s377 + $0x8] sm:$0xff]
        %v1022 = vld [vmem:[%s377 + $0x10] sm:$0xff]
        %v1023 = vld [vmem:[%s377 + $0x18] sm:$0xff]
        %v1024 = vld [vmem:[%s387] sm:$0xff]
        %v1025 = vld [vmem:[%s387 + $0x8] sm:$0xff]
        %v1026 = vld [vmem:[%s387 + $0x10] sm:$0xff]
        %v1027 = vld [vmem:[%s387 + $0x18] sm:$0xff]
        %v1028 = vmul.f32 %v1012, %v746
        %v1029 = vmul.f32 %v1013, %v750
        %v1030 = vmul.f32 %v1014, %v754
        %v1031 = vmul.f32 %v1015, %v758
        %v1032 = vsub.f32 %v1028, %v1016
        %v1033 = vsub.f32 %v1029, %v1017
        %v1034 = vsub.f32 %v1030, %v1018
        %v1035 = vsub.f32 %v1031, %v1019
        %v1036 = vmul.f32 %v1032, %v1032
        %v1037 = vmul.f32 %v1033, %v1033
        %v1038 = vmul.f32 %v1034, %v1034
        %v1039 = vmul.f32 %v1035, %v1035
        %1040 = vadd.xlane.f32.xlu0 %v1036
        %v1041 = vpop.xlane.xlu0 %1040
        %1042 = vadd.xlane.f32.xlu0 %v1037
        %v1043 = vpop.xlane.xlu0 %1042
        %1044 = vadd.xlane.f32.xlu0 %v1038
        %v1045 = vpop.xlane.xlu0 %1044
        %1046 = vadd.xlane.f32.xlu0 %v1039
        %v1047 = vpop.xlane.xlu0 %1046
        %v1048 = vrsqrt.pop %v1041
        %v1049 = vmul.f32 %v1048, %v1041
        %v1050 = vmul.f32 %v1049, %v1048
        %v1051 = vmul.f32 0.5, %v1050
        %v1052 = vsub.f32 1.5, %v1051
        %v1053 = vmul.f32 %v1048, %v1052
        %v1054 = vmul.f32 %v1041, %v1053
        %vm1055 = vcmp.eq.f32.partialorder %v1041, inf
        %v1056 = vsel %vm1055, %v1041, %v1054
        %vm1057 = vcmp.eq.f32.partialorder %v1041, 0.0
        %v1058 = vand.u32 %v1041, 2147483648
        %v1059 = vsel %vm1057, %v1058, %v1056
        %v1060 = vrsqrt.pop %v1043
        %v1061 = vmul.f32 %v1060, %v1043
        %v1062 = vmul.f32 %v1061, %v1060
        %v1063 = vmul.f32 0.5, %v1062
        %v1064 = vsub.f32 1.5, %v1063
        %v1065 = vmul.f32 %v1060, %v1064
        %v1066 = vmul.f32 %v1043, %v1065
        %vm1067 = vcmp.eq.f32.partialorder %v1043, inf
        %v1068 = vsel %vm1067, %v1043, %v1066
        %vm1069 = vcmp.eq.f32.partialorder %v1043, 0.0
        %v1070 = vand.u32 %v1043, 2147483648
        %v1071 = vsel %vm1069, %v1070, %v1068
        %v1072 = vrsqrt.pop %v1045
        %v1073 = vmul.f32 %v1072, %v1045
        %v1074 = vmul.f32 %v1073, %v1072
        %v1075 = vmul.f32 0.5, %v1074
        %v1076 = vsub.f32 1.5, %v1075
        %v1077 = vmul.f32 %v1072, %v1076
        %v1078 = vmul.f32 %v1045, %v1077
        %vm1079 = vcmp.eq.f32.partialorder %v1045, inf
        %v1080 = vsel %vm1079, %v1045, %v1078
        %vm1081 = vcmp.eq.f32.partialorder %v1045, 0.0
        %v1082 = vand.u32 %v1045, 2147483648
        %v1083 = vsel %vm1081, %v1082, %v1080
        %v1084 = vrsqrt.pop %v1047
        %v1085 = vmul.f32 %v1084, %v1047
        %v1086 = vmul.f32 %v1085, %v1084
        %v1087 = vmul.f32 0.5, %v1086
        %v1088 = vsub.f32 1.5, %v1087
        %v1089 = vmul.f32 %v1084, %v1088
        %v1090 = vmul.f32 %v1047, %v1089
        %vm1091 = vcmp.eq.f32.partialorder %v1047, inf
        %v1092 = vsel %vm1091, %v1047, %v1090
        %vm1093 = vcmp.eq.f32.partialorder %v1047, 0.0
        %v1094 = vand.u32 %v1047, 2147483648
        %v1095 = vsel %vm1093, %v1094, %v1092
        %v1096 = vadd.f32 %v1020, %v998
        %v1097 = vadd.f32 %v1021, %v1002
        %v1098 = vadd.f32 %v1022, %v1006
        %v1099 = vadd.f32 %v1023, %v1010
        %v1100 = vsub.f32 %v1096, %v1024
        %v1101 = vsub.f32 %v1097, %v1025
        %v1102 = vsub.f32 %v1098, %v1026
        %v1103 = vsub.f32 %v1099, %v1027
        %v1104 = vmul.f32 %v1100, 0.5
        %v1105 = vmul.f32 %v1101, 0.5
        %v1106 = vmul.f32 %v1102, 0.5
        %v1107 = vmul.f32 %v1103, 0.5
        %v1108 = vand.u32 2147483647, %v1104
        %vm1109 = vcmp.le.f32.partialorder %v1108, 0.7853982
        %vm1110 = vcmp.lt.s32.totalorder %v1104, 0
        %v1111 = vand.u32 %v1104, 2139095040
        %v1112 = vshrl.u32 %v1111, 23
        %v1113 = vsub.s32 %v1112, 127
        %v1114 = vand.u32 2147483647, %v1104
        %v1115 = vand.u32 %v1114, 8388607
        %v1116 = vor.u32 %v1115, 8388608
        %v1117 = vsub.s32 0, %v1116
        %v1118 = vadd.s32 %v1113, 1
        %vm1119 = vcmp.gt.s32.totalorder %v1118, 0
        %v1120 = vsel %vm1119, %v1118, 0
        %v1121 = vshrl.u32 %v1120, 5
        %v1122 = vand.u32 %v1120, 31
        %v1123 = vsub.s32 32, %v1122
        %v1124 = vshrl.u32 683565275, %v1123
        %v1125 = vshll.u32 683565275, %v1122
        %v1126 = vshrl.u32 2475754826, %v1123
        %v1127 = vor.u32 %v1125, %v1126
        %v1128 = vshll.u32 2475754826, %v1122
        %v1129 = vshrl.u32 2131351028, %v1123
        %v1130 = vor.u32 %v1128, %v1129
        %v1131 = vshll.u32 2131351028, %v1122
        %v1132 = vshrl.u32 2102212464, %v1123
        %v1133 = vor.u32 %v1131, %v1132
        %v1134 = vshll.u32 2102212464, %v1122
        %v1135 = vshrl.u32 920167782, %v1123
        %v1136 = vor.u32 %v1134, %v1135
        %v1137 = vshll.u32 920167782, %v1122
        %v1138 = vshrl.u32 1326507024, %v1123
        %v1139 = vor.u32 %v1137, %v1138
        %vm1140 = vcmp.lt.s32.totalorder %v1121, 1
        %vm1141 = vcmp.lt.s32.totalorder %v1121, 2
        %vm1142 = vcmp.lt.s32.totalorder %v1121, 3
        %vm1143 = vcmp.lt.s32.totalorder %v1121, 4
        %v1144 = vsel %vm1140, %v1124, %v1127
        %v1145 = vsel %vm1143, %v1133, 2102212464
        %v1146 = vsel %vm1142, %v1130, %v1145
        %v1147 = vsel %vm1141, %v1144, %v1146
        %v1148 = vsel %vm1140, %v1127, %v1130
        %v1149 = vsel %vm1143, %v1136, 920167782
        %v1150 = vsel %vm1142, %v1133, %v1149
        %v1151 = vsel %vm1141, %v1148, %v1150
        %v1152 = vsel %vm1140, %v1130, %v1133
        %v1153 = vsel %vm1143, %v1139, 1326507024
        %v1154 = vsel %vm1142, %v1136, %v1153
        %v1155 = vsel %vm1141, %v1152, %v1154
        %v1156 = vshll.u32 %v1116, 8
        %v1157 = vand.u32 %v1156, 65535
        %v1158 = vshrl.u32 %v1156, 16
        %v1159 = vand.u32 %v1155, 65535
        %v1160 = vshrl.u32 %v1155, 16
        %v1161 = vmul.u32 %v1157, %v1159
        %v1162 = vmul.u32 %v1157, %v1160
        %v1163 = vmul.u32 %v1158, %v1159
        %v1164 = vmul.u32 %v1158, %v1160
        %v1165 = vshll.u32 %v1162, 16
        %v1166 = vshrl.u32 %v1162, 16
        %v1167 = vshll.u32 %v1163, 16
        %v1168 = vshrl.u32 %v1163, 16
        %vm1169 = vc.u32 %v1161, %v1165
        %v1170 = vsel %vm1169, 1, 0
        %v1171 = vadd.s32 %v1161, %v1165
        %v1172 = vadd.s32 %v1164, %v1170
        %vm1173 = vc.u32 %v1171, %v1167
        %v1174 = vsel %vm1173, 1, 0
        %v1175 = vadd.s32 %v1171, %v1167
        %v1176 = vadd.s32 %v1172, %v1174
        %v1177 = vadd.s32 %v1176, %v1166
        %v1178 = vadd.s32 %v1177, %v1168
        %v1179 = vand.u32 %v1156, 65535
        %v1180 = vshrl.u32 %v1156, 16
        %v1181 = vand.u32 %v1151, 65535
        %v1182 = vshrl.u32 %v1151, 16
        %v1183 = vmul.u32 %v1179, %v1181
        %v1184 = vmul.u32 %v1179, %v1182
        %v1185 = vmul.u32 %v1180, %v1181
        %v1186 = vmul.u32 %v1180, %v1182
        %v1187 = vshll.u32 %v1184, 16
        %v1188 = vshrl.u32 %v1184, 16
        %v1189 = vshll.u32 %v1185, 16
        %v1190 = vshrl.u32 %v1185, 16
        %vm1191 = vc.u32 %v1183, %v1187
        %v1192 = vsel %vm1191, 1, 0
        %v1193 = vadd.s32 %v1183, %v1187
        %v1194 = vadd.s32 %v1186, %v1192
        %vm1195 = vc.u32 %v1193, %v1189
        %v1196 = vsel %vm1195, 1, 0
        %v1197 = vadd.s32 %v1193, %v1189
        %v1198 = vadd.s32 %v1194, %v1196
        %v1199 = vadd.s32 %v1198, %v1188
        %v1200 = vadd.s32 %v1199, %v1190
        %v1201 = vmul.u32 %v1156, %v1147
        %v1202 = vadd.s32 %v1178, %v1197
        %vm1203 = vc.u32 %v1178, %v1197
        %v1204 = vadd.s32 %v1200, 1
        %v1205 = vsel %vm1203, %v1204, %v1200
        %v1206 = vadd.s32 %v1201, %v1205
        %v1207 = vadd.s32 %v1206, 536870912
        %v1208 = vshrl.u32 %v1207, 30
        %v1209 = vshll.u32 %v1208, 30
        %v1210 = vsub.s32 %v1206, %v1209
        %vm1211 = vcmp.lt.s32.totalorder %v1210, 0
        %v1212 = vsub.s32 0, %v1210
        %v1213 = vsel %vm1211, %v1212, %v1210
        %v1214 = vclz %v1213
        %v1215 = vsub.s32 %v1214, 2
        %vm1216 = vcmp.gt.s32.totalorder 0, %v1215
        %v1217 = vsel %vm1216, 0, %v1215
        %v1218 = vsub.s32 32, %v1217
        %v1219 = vshll.u32 %v1210, %v1217
        %v1220 = vshrl.u32 %v1202, %v1218
        %v1221 = vor.u32 %v1219, %v1220
        %v1222 = vsub.s32 4294967266, %v1217
        %v1223 = vadd.s32 %v1222, 127
        %v1224 = vshll.u32 %v1223, 23
        %v1225 = vor.u32 4788187, %v1224
        %v1226 = vand.u32 2147483647, %v1225
        %v1228 = vcvt.s32.f32 %v1221
        %v1229 = vmul.f32 %v1228, %v1226
        %v1230 = vxor.u32 %v1229, 2147483648
        %v1231 = vsel %vm1110, %v1230, %v1229
        %v1232 = vsub.s32 4, %v1208
        %v1233 = vsel %vm1110, %v1232, %v1208
        %v1234 = vsel %vm1109, %v1104, %v1231
        %v1235 = vsel %vm1109, 0, %v1233
        %v1236 = vmul.f32 %v1234, %v1234
        %v1237 = vmul.f32 %v1236, -0.001358992
        %v1238 = vadd.f32 %v1237, 0.041655596
        %v1239 = vmul.f32 %v1236, %v1238
        %v1240 = vadd.f32 %v1239, -0.4999988
        %v1241 = vmul.f32 %v1236, %v1240
        %v1242 = vadd.f32 1.0, %v1241
        %v1243 = vmul.f32 %v1234, %v1234
        %v1244 = vmul.f32 %v1243, -0.00019511016
        %v1245 = vadd.f32 %v1244, 0.008332121
        %v1246 = vmul.f32 %v1243, %v1245
        %v1247 = vadd.f32 %v1246, -0.16666654
        %v1248 = vmul.f32 %v1243, %v1247
        %v1249 = vadd.f32 %v1248, 1.0
        %v1250 = vmul.f32 %v1249, %v1234
        %vm1251 = vweird.f32 %v1104
        %v1252 = vadd.s32 %v1235, 3
        %v1253 = vand.u32 %v1252, 3
        %vm1254 = vcmp.lt.s32.totalorder %v1253, 2
        %vm1255 = vcmp.eq.s32.totalorder %v1253, 0
        %v1256 = vxor.u32 %v1250, 2147483648
        %v1257 = vsel %vm1255, %v1242, %v1256
        %vm1258 = vcmp.eq.s32.totalorder %v1253, 2
        %v1259 = vxor.u32 %v1242, 2147483648
        %v1260 = vsel %vm1258, %v1259, %v1250
        %v1261 = vsel %vm1254, %v1257, %v1260
        %v1262 = vsel %vm1251, nan, %v1261
        %v1263 = vand.u32 2147483647, %v1105
        %vm1264 = vcmp.le.f32.partialorder %v1263, 0.7853982
        %vm1265 = vcmp.lt.s32.totalorder %v1105, 0
        %v1266 = vand.u32 %v1105, 2139095040
        %v1267 = vshrl.u32 %v1266, 23
        %v1268 = vsub.s32 %v1267, 127
        %v1269 = vand.u32 2147483647, %v1105
        %v1270 = vand.u32 %v1269, 8388607
        %v1271 = vor.u32 %v1270, 8388608
        %v1272 = vsub.s32 0, %v1271
        %v1273 = vadd.s32 %v1268, 1
        %vm1274 = vcmp.gt.s32.totalorder %v1273, 0
        %v1275 = vsel %vm1274, %v1273, 0
        %v1276 = vshrl.u32 %v1275, 5
        %v1277 = vand.u32 %v1275, 31
        %v1278 = vsub.s32 32, %v1277
        %v1279 = vshrl.u32 683565275, %v1278
        %v1280 = vshll.u32 683565275, %v1277
        %v1281 = vshrl.u32 2475754826, %v1278
        %v1282 = vor.u32 %v1280, %v1281
        %v1283 = vshll.u32 2475754826, %v1277
        %v1284 = vshrl.u32 2131351028, %v1278
        %v1285 = vor.u32 %v1283, %v1284
        %v1286 = vshll.u32 2131351028, %v1277
        %v1287 = vshrl.u32 2102212464, %v1278
        %v1288 = vor.u32 %v1286, %v1287
        %v1289 = vshll.u32 2102212464, %v1277
        %v1290 = vshrl.u32 920167782, %v1278
        %v1291 = vor.u32 %v1289, %v1290
        %v1292 = vshll.u32 920167782, %v1277
        %v1293 = vshrl.u32 1326507024, %v1278
        %v1294 = vor.u32 %v1292, %v1293
        %vm1295 = vcmp.lt.s32.totalorder %v1276, 1
        %vm1296 = vcmp.lt.s32.totalorder %v1276, 2
        %vm1297 = vcmp.lt.s32.totalorder %v1276, 3
        %vm1298 = vcmp.lt.s32.totalorder %v1276, 4
        %v1299 = vsel %vm1295, %v1279, %v1282
        %v1300 = vsel %vm1298, %v1288, 2102212464
        %v1301 = vsel %vm1297, %v1285, %v1300
        %v1302 = vsel %vm1296, %v1299, %v1301
        %v1303 = vsel %vm1295, %v1282, %v1285
        %v1304 = vsel %vm1298, %v1291, 920167782
        %v1305 = vsel %vm1297, %v1288, %v1304
        %v1306 = vsel %vm1296, %v1303, %v1305
        %v1307 = vsel %vm1295, %v1285, %v1288
        %v1308 = vsel %vm1298, %v1294, 1326507024
        %v1309 = vsel %vm1297, %v1291, %v1308
        %v1310 = vsel %vm1296, %v1307, %v1309
        %v1311 = vshll.u32 %v1271, 8
        %v1312 = vand.u32 %v1311, 65535
        %v1313 = vshrl.u32 %v1311, 16
        %v1314 = vand.u32 %v1310, 65535
        %v1315 = vshrl.u32 %v1310, 16
        %v1316 = vmul.u32 %v1312, %v1314
        %v1317 = vmul.u32 %v1312, %v1315
        %v1318 = vmul.u32 %v1313, %v1314
        %v1319 = vmul.u32 %v1313, %v1315
        %v1320 = vshll.u32 %v1317, 16
        %v1321 = vshrl.u32 %v1317, 16
        %v1322 = vshll.u32 %v1318, 16
        %v1323 = vshrl.u32 %v1318, 16
        %vm1324 = vc.u32 %v1316, %v1320
        %v1325 = vsel %vm1324, 1, 0
        %v1326 = vadd.s32 %v1316, %v1320
        %v1327 = vadd.s32 %v1319, %v1325
        %vm1328 = vc.u32 %v1326, %v1322
        %v1329 = vsel %vm1328, 1, 0
        %v1330 = vadd.s32 %v1326, %v1322
        %v1331 = vadd.s32 %v1327, %v1329
        %v1332 = vadd.s32 %v1331, %v1321
        %v1333 = vadd.s32 %v1332, %v1323
        %v1334 = vand.u32 %v1311, 65535
        %v1335 = vshrl.u32 %v1311, 16
        %v1336 = vand.u32 %v1306, 65535
        %v1337 = vshrl.u32 %v1306, 16
        %v1338 = vmul.u32 %v1334, %v1336
        %v1339 = vmul.u32 %v1334, %v1337
        %v1340 = vmul.u32 %v1335, %v1336
        %v1341 = vmul.u32 %v1335, %v1337
        %v1342 = vshll.u32 %v1339, 16
        %v1343 = vshrl.u32 %v1339, 16
        %v1344 = vshll.u32 %v1340, 16
        %v1345 = vshrl.u32 %v1340, 16
        %vm1346 = vc.u32 %v1338, %v1342
        %v1347 = vsel %vm1346, 1, 0
        %v1348 = vadd.s32 %v1338, %v1342
        %v1349 = vadd.s32 %v1341, %v1347
        %vm1350 = vc.u32 %v1348, %v1344
        %v1351 = vsel %vm1350, 1, 0
        %v1352 = vadd.s32 %v1348, %v1344
        %v1353 = vadd.s32 %v1349, %v1351
        %v1354 = vadd.s32 %v1353, %v1343
        %v1355 = vadd.s32 %v1354, %v1345
        %v1356 = vmul.u32 %v1311, %v1302
        %v1357 = vadd.s32 %v1333, %v1352
        %vm1358 = vc.u32 %v1333, %v1352
        %v1359 = vadd.s32 %v1355, 1
        %v1360 = vsel %vm1358, %v1359, %v1355
        %v1361 = vadd.s32 %v1356, %v1360
        %v1362 = vadd.s32 %v1361, 536870912
        %v1363 = vshrl.u32 %v1362, 30
        %v1364 = vshll.u32 %v1363, 30
        %v1365 = vsub.s32 %v1361, %v1364
        %vm1366 = vcmp.lt.s32.totalorder %v1365, 0
        %v1367 = vsub.s32 0, %v1365
        %v1368 = vsel %vm1366, %v1367, %v1365
        %v1369 = vclz %v1368
        %v1370 = vsub.s32 %v1369, 2
        %vm1371 = vcmp.gt.s32.totalorder 0, %v1370
        %v1372 = vsel %vm1371, 0, %v1370
        %v1373 = vsub.s32 32, %v1372
        %v1374 = vshll.u32 %v1365, %v1372
        %v1375 = vshrl.u32 %v1357, %v1373
        %v1376 = vor.u32 %v1374, %v1375
        %v1377 = vsub.s32 4294967266, %v1372
        %v1378 = vadd.s32 %v1377, 127
        %v1379 = vshll.u32 %v1378, 23
        %v1380 = vor.u32 4788187, %v1379
        %v1381 = vand.u32 2147483647, %v1380
        %v1383 = vcvt.s32.f32 %v1376
        %v1384 = vmul.f32 %v1383, %v1381
        %v1385 = vxor.u32 %v1384, 2147483648
        %v1386 = vsel %vm1265, %v1385, %v1384
        %v1387 = vsub.s32 4, %v1363
        %v1388 = vsel %vm1265, %v1387, %v1363
        %v1389 = vsel %vm1264, %v1105, %v1386
        %v1390 = vsel %vm1264, 0, %v1388
        %v1391 = vmul.f32 %v1389, %v1389
        %v1392 = vmul.f32 %v1391, -0.001358992
        %v1393 = vadd.f32 %v1392, 0.041655596
        %v1394 = vmul.f32 %v1391, %v1393
        %v1395 = vadd.f32 %v1394, -0.4999988
        %v1396 = vmul.f32 %v1391, %v1395
        %v1397 = vadd.f32 1.0, %v1396
        %v1398 = vmul.f32 %v1389, %v1389
        %v1399 = vmul.f32 %v1398, -0.00019511016
        %v1400 = vadd.f32 %v1399, 0.008332121
        %v1401 = vmul.f32 %v1398, %v1400
        %v1402 = vadd.f32 %v1401, -0.16666654
        %v1403 = vmul.f32 %v1398, %v1402
        %v1404 = vadd.f32 %v1403, 1.0
        %v1405 = vmul.f32 %v1404, %v1389
        %vm1406 = vweird.f32 %v1105
        %v1407 = vadd.s32 %v1390, 3
        %v1408 = vand.u32 %v1407, 3
        %vm1409 = vcmp.lt.s32.totalorder %v1408, 2
        %vm1410 = vcmp.eq.s32.totalorder %v1408, 0
        %v1411 = vxor.u32 %v1405, 2147483648
        %v1412 = vsel %vm1410, %v1397, %v1411
        %vm1413 = vcmp.eq.s32.totalorder %v1408, 2
        %v1414 = vxor.u32 %v1397, 2147483648
        %v1415 = vsel %vm1413, %v1414, %v1405
        %v1416 = vsel %vm1409, %v1412, %v1415
        %v1417 = vsel %vm1406, nan, %v1416
        %v1418 = vand.u32 2147483647, %v1106
        %vm1419 = vcmp.le.f32.partialorder %v1418, 0.7853982
        %vm1420 = vcmp.lt.s32.totalorder %v1106, 0
        %v1421 = vand.u32 %v1106, 2139095040
        %v1422 = vshrl.u32 %v1421, 23
        %v1423 = vsub.s32 %v1422, 127
        %v1424 = vand.u32 2147483647, %v1106
        %v1425 = vand.u32 %v1424, 8388607
        %v1426 = vor.u32 %v1425, 8388608
        %v1427 = vsub.s32 0, %v1426
        %v1428 = vadd.s32 %v1423, 1
        %vm1429 = vcmp.gt.s32.totalorder %v1428, 0
        %v1430 = vsel %vm1429, %v1428, 0
        %v1431 = vshrl.u32 %v1430, 5
        %v1432 = vand.u32 %v1430, 31
        %v1433 = vsub.s32 32, %v1432
        %v1434 = vshrl.u32 683565275, %v1433
        %v1435 = vshll.u32 683565275, %v1432
        %v1436 = vshrl.u32 2475754826, %v1433
        %v1437 = vor.u32 %v1435, %v1436
        %v1438 = vshll.u32 2475754826, %v1432
        %v1439 = vshrl.u32 2131351028, %v1433
        %v1440 = vor.u32 %v1438, %v1439
        %v1441 = vshll.u32 2131351028, %v1432
        %v1442 = vshrl.u32 2102212464, %v1433
        %v1443 = vor.u32 %v1441, %v1442
        %v1444 = vshll.u32 2102212464, %v1432
        %v1445 = vshrl.u32 920167782, %v1433
        %v1446 = vor.u32 %v1444, %v1445
        %v1447 = vshll.u32 920167782, %v1432
        %v1448 = vshrl.u32 1326507024, %v1433
        %v1449 = vor.u32 %v1447, %v1448
        %vm1450 = vcmp.lt.s32.totalorder %v1431, 1
        %vm1451 = vcmp.lt.s32.totalorder %v1431, 2
        %vm1452 = vcmp.lt.s32.totalorder %v1431, 3
        %vm1453 = vcmp.lt.s32.totalorder %v1431, 4
        %v1454 = vsel %vm1450, %v1434, %v1437
        %v1455 = vsel %vm1453, %v1443, 2102212464
        %v1456 = vsel %vm1452, %v1440, %v1455
        %v1457 = vsel %vm1451, %v1454, %v1456
        %v1458 = vsel %vm1450, %v1437, %v1440
        %v1459 = vsel %vm1453, %v1446, 920167782
        %v1460 = vsel %vm1452, %v1443, %v1459
        %v1461 = vsel %vm1451, %v1458, %v1460
        %v1462 = vsel %vm1450, %v1440, %v1443
        %v1463 = vsel %vm1453, %v1449, 1326507024
        %v1464 = vsel %vm1452, %v1446, %v1463
        %v1465 = vsel %vm1451, %v1462, %v1464
        %v1466 = vshll.u32 %v1426, 8
        %v1467 = vand.u32 %v1466, 65535
        %v1468 = vshrl.u32 %v1466, 16
        %v1469 = vand.u32 %v1465, 65535
        %v1470 = vshrl.u32 %v1465, 16
        %v1471 = vmul.u32 %v1467, %v1469
        %v1472 = vmul.u32 %v1467, %v1470
        %v1473 = vmul.u32 %v1468, %v1469
        %v1474 = vmul.u32 %v1468, %v1470
        %v1475 = vshll.u32 %v1472, 16
        %v1476 = vshrl.u32 %v1472, 16
        %v1477 = vshll.u32 %v1473, 16
        %v1478 = vshrl.u32 %v1473, 16
        %vm1479 = vc.u32 %v1471, %v1475
        %v1480 = vsel %vm1479, 1, 0
        %v1481 = vadd.s32 %v1471, %v1475
        %v1482 = vadd.s32 %v1474, %v1480
        %vm1483 = vc.u32 %v1481, %v1477
        %v1484 = vsel %vm1483, 1, 0
        %v1485 = vadd.s32 %v1481, %v1477
        %v1486 = vadd.s32 %v1482, %v1484
        %v1487 = vadd.s32 %v1486, %v1476
        %v1488 = vadd.s32 %v1487, %v1478
        %v1489 = vand.u32 %v1466, 65535
        %v1490 = vshrl.u32 %v1466, 16
        %v1491 = vand.u32 %v1461, 65535
        %v1492 = vshrl.u32 %v1461, 16
        %v1493 = vmul.u32 %v1489, %v1491
        %v1494 = vmul.u32 %v1489, %v1492
        %v1495 = vmul.u32 %v1490, %v1491
        %v1496 = vmul.u32 %v1490, %v1492
        %v1497 = vshll.u32 %v1494, 16
        %v1498 = vshrl.u32 %v1494, 16
        %v1499 = vshll.u32 %v1495, 16
        %v1500 = vshrl.u32 %v1495, 16
        %vm1501 = vc.u32 %v1493, %v1497
        %v1502 = vsel %vm1501, 1, 0
        %v1503 = vadd.s32 %v1493, %v1497
        %v1504 = vadd.s32 %v1496, %v1502
        %vm1505 = vc.u32 %v1503, %v1499
        %v1506 = vsel %vm1505, 1, 0
        %v1507 = vadd.s32 %v1503, %v1499
        %v1508 = vadd.s32 %v1504, %v1506
        %v1509 = vadd.s32 %v1508, %v1498
        %v1510 = vadd.s32 %v1509, %v1500
        %v1511 = vmul.u32 %v1466, %v1457
        %v1512 = vadd.s32 %v1488, %v1507
        %vm1513 = vc.u32 %v1488, %v1507
        %v1514 = vadd.s32 %v1510, 1
        %v1515 = vsel %vm1513, %v1514, %v1510
        %v1516 = vadd.s32 %v1511, %v1515
        %v1517 = vadd.s32 %v1516, 536870912
        %v1518 = vshrl.u32 %v1517, 30
        %v1519 = vshll.u32 %v1518, 30
        %v1520 = vsub.s32 %v1516, %v1519
        %vm1521 = vcmp.lt.s32.totalorder %v1520, 0
        %v1522 = vsub.s32 0, %v1520
        %v1523 = vsel %vm1521, %v1522, %v1520
        %v1524 = vclz %v1523
        %v1525 = vsub.s32 %v1524, 2
        %vm1526 = vcmp.gt.s32.totalorder 0, %v1525
        %v1527 = vsel %vm1526, 0, %v1525
        %v1528 = vsub.s32 32, %v1527
        %v1529 = vshll.u32 %v1520, %v1527
        %v1530 = vshrl.u32 %v1512, %v1528
        %v1531 = vor.u32 %v1529, %v1530
        %v1532 = vsub.s32 4294967266, %v1527
        %v1533 = vadd.s32 %v1532, 127
        %v1534 = vshll.u32 %v1533, 23
        %v1535 = vor.u32 4788187, %v1534
        %v1536 = vand.u32 2147483647, %v1535
        %v1538 = vcvt.s32.f32 %v1531
        %v1539 = vmul.f32 %v1538, %v1536
        %v1540 = vxor.u32 %v1539, 2147483648
        %v1541 = vsel %vm1420, %v1540, %v1539
        %v1542 = vsub.s32 4, %v1518
        %v1543 = vsel %vm1420, %v1542, %v1518
        %v1544 = vsel %vm1419, %v1106, %v1541
        %v1545 = vsel %vm1419, 0, %v1543
        %v1546 = vmul.f32 %v1544, %v1544
        %v1547 = vmul.f32 %v1546, -0.001358992
        %v1548 = vadd.f32 %v1547, 0.041655596
        %v1549 = vmul.f32 %v1546, %v1548
        %v1550 = vadd.f32 %v1549, -0.4999988
        %v1551 = vmul.f32 %v1546, %v1550
        %v1552 = vadd.f32 1.0, %v1551
        %v1553 = vmul.f32 %v1544, %v1544
        %v1554 = vmul.f32 %v1553, -0.00019511016
        %v1555 = vadd.f32 %v1554, 0.008332121
        %v1556 = vmul.f32 %v1553, %v1555
        %v1557 = vadd.f32 %v1556, -0.16666654
        %v1558 = vmul.f32 %v1553, %v1557
        %v1559 = vadd.f32 %v1558, 1.0
        %v1560 = vmul.f32 %v1559, %v1544
        %vm1561 = vweird.f32 %v1106
        %v1562 = vadd.s32 %v1545, 3
        %v1563 = vand.u32 %v1562, 3
        %vm1564 = vcmp.lt.s32.totalorder %v1563, 2
        %vm1565 = vcmp.eq.s32.totalorder %v1563, 0
        %v1566 = vxor.u32 %v1560, 2147483648
        %v1567 = vsel %vm1565, %v1552, %v1566
        %vm1568 = vcmp.eq.s32.totalorder %v1563, 2
        %v1569 = vxor.u32 %v1552, 2147483648
        %v1570 = vsel %vm1568, %v1569, %v1560
        %v1571 = vsel %vm1564, %v1567, %v1570
        %v1572 = vsel %vm1561, nan, %v1571
        %v1573 = vand.u32 2147483647, %v1107
        %vm1574 = vcmp.le.f32.partialorder %v1573, 0.7853982
        %vm1575 = vcmp.lt.s32.totalorder %v1107, 0
        %v1576 = vand.u32 %v1107, 2139095040
        %v1577 = vshrl.u32 %v1576, 23
        %v1578 = vsub.s32 %v1577, 127
        %v1579 = vand.u32 2147483647, %v1107
        %v1580 = vand.u32 %v1579, 8388607
        %v1581 = vor.u32 %v1580, 8388608
        %v1582 = vsub.s32 0, %v1581
        %v1583 = vadd.s32 %v1578, 1
        %vm1584 = vcmp.gt.s32.totalorder %v1583, 0
        %v1585 = vsel %vm1584, %v1583, 0
        %v1586 = vshrl.u32 %v1585, 5
        %v1587 = vand.u32 %v1585, 31
        %v1588 = vsub.s32 32, %v1587
        %v1589 = vshrl.u32 683565275, %v1588
        %v1590 = vshll.u32 683565275, %v1587
        %v1591 = vshrl.u32 2475754826, %v1588
        %v1592 = vor.u32 %v1590, %v1591
        %v1593 = vshll.u32 2475754826, %v1587
        %v1594 = vshrl.u32 2131351028, %v1588
        %v1595 = vor.u32 %v1593, %v1594
        %v1596 = vshll.u32 2131351028, %v1587
        %v1597 = vshrl.u32 2102212464, %v1588
        %v1598 = vor.u32 %v1596, %v1597
        %v1599 = vshll.u32 2102212464, %v1587
        %v1600 = vshrl.u32 920167782, %v1588
        %v1601 = vor.u32 %v1599, %v1600
        %v1602 = vshll.u32 920167782, %v1587
        %v1603 = vshrl.u32 1326507024, %v1588
        %v1604 = vor.u32 %v1602, %v1603
        %vm1605 = vcmp.lt.s32.totalorder %v1586, 1
        %vm1606 = vcmp.lt.s32.totalorder %v1586, 2
        %vm1607 = vcmp.lt.s32.totalorder %v1586, 3
        %vm1608 = vcmp.lt.s32.totalorder %v1586, 4
        %v1609 = vsel %vm1605, %v1589, %v1592
        %v1610 = vsel %vm1608, %v1598, 2102212464
        %v1611 = vsel %vm1607, %v1595, %v1610
        %v1612 = vsel %vm1606, %v1609, %v1611
        %v1613 = vsel %vm1605, %v1592, %v1595
        %v1614 = vsel %vm1608, %v1601, 920167782
        %v1615 = vsel %vm1607, %v1598, %v1614
        %v1616 = vsel %vm1606, %v1613, %v1615
        %v1617 = vsel %vm1605, %v1595, %v1598
        %v1618 = vsel %vm1608, %v1604, 1326507024
        %v1619 = vsel %vm1607, %v1601, %v1618
        %v1620 = vsel %vm1606, %v1617, %v1619
        %v1621 = vshll.u32 %v1581, 8
        %v1622 = vand.u32 %v1621, 65535
        %v1623 = vshrl.u32 %v1621, 16
        %v1624 = vand.u32 %v1620, 65535
        %v1625 = vshrl.u32 %v1620, 16
        %v1626 = vmul.u32 %v1622, %v1624
        %v1627 = vmul.u32 %v1622, %v1625
        %v1628 = vmul.u32 %v1623, %v1624
        %v1629 = vmul.u32 %v1623, %v1625
        %v1630 = vshll.u32 %v1627, 16
        %v1631 = vshrl.u32 %v1627, 16
        %v1632 = vshll.u32 %v1628, 16
        %v1633 = vshrl.u32 %v1628, 16
        %vm1634 = vc.u32 %v1626, %v1630
        %v1635 = vsel %vm1634, 1, 0
        %v1636 = vadd.s32 %v1626, %v1630
        %v1637 = vadd.s32 %v1629, %v1635
        %vm1638 = vc.u32 %v1636, %v1632
        %v1639 = vsel %vm1638, 1, 0
        %v1640 = vadd.s32 %v1636, %v1632
        %v1641 = vadd.s32 %v1637, %v1639
        %v1642 = vadd.s32 %v1641, %v1631
        %v1643 = vadd.s32 %v1642, %v1633
        %v1644 = vand.u32 %v1621, 65535
        %v1645 = vshrl.u32 %v1621, 16
        %v1646 = vand.u32 %v1616, 65535
        %v1647 = vshrl.u32 %v1616, 16
        %v1648 = vmul.u32 %v1644, %v1646
        %v1649 = vmul.u32 %v1644, %v1647
        %v1650 = vmul.u32 %v1645, %v1646
        %v1651 = vmul.u32 %v1645, %v1647
        %v1652 = vshll.u32 %v1649, 16
        %v1653 = vshrl.u32 %v1649, 16
        %v1654 = vshll.u32 %v1650, 16
        %v1655 = vshrl.u32 %v1650, 16
        %vm1656 = vc.u32 %v1648, %v1652
        %v1657 = vsel %vm1656, 1, 0
        %v1658 = vadd.s32 %v1648, %v1652
        %v1659 = vadd.s32 %v1651, %v1657
        %vm1660 = vc.u32 %v1658, %v1654
        %v1661 = vsel %vm1660, 1, 0
        %v1662 = vadd.s32 %v1658, %v1654
        %v1663 = vadd.s32 %v1659, %v1661
        %v1664 = vadd.s32 %v1663, %v1653
        %v1665 = vadd.s32 %v1664, %v1655
        %v1666 = vmul.u32 %v1621, %v1612
        %v1667 = vadd.s32 %v1643, %v1662
        %vm1668 = vc.u32 %v1643, %v1662
        %v1669 = vadd.s32 %v1665, 1
        %v1670 = vsel %vm1668, %v1669, %v1665
        %v1671 = vadd.s32 %v1666, %v1670
        %v1672 = vadd.s32 %v1671, 536870912
        %v1673 = vshrl.u32 %v1672, 30
        %v1674 = vshll.u32 %v1673, 30
        %v1675 = vsub.s32 %v1671, %v1674
        %vm1676 = vcmp.lt.s32.totalorder %v1675, 0
        %v1677 = vsub.s32 0, %v1675
        %v1678 = vsel %vm1676, %v1677, %v1675
        %v1679 = vclz %v1678
        %v1680 = vsub.s32 %v1679, 2
        %vm1681 = vcmp.gt.s32.totalorder 0, %v1680
        %v1682 = vsel %vm1681, 0, %v1680
        %v1683 = vsub.s32 32, %v1682
        %v1684 = vshll.u32 %v1675, %v1682
        %v1685 = vshrl.u32 %v1667, %v1683
        %v1686 = vor.u32 %v1684, %v1685
        %v1687 = vsub.s32 4294967266, %v1682
        %v1688 = vadd.s32 %v1687, 127
        %v1689 = vshll.u32 %v1688, 23
        %v1690 = vor.u32 4788187, %v1689
        %v1691 = vand.u32 2147483647, %v1690
        %v1693 = vcvt.s32.f32 %v1686
        %v1694 = vmul.f32 %v1693, %v1691
        %v1695 = vxor.u32 %v1694, 2147483648
        %v1696 = vsel %vm1575, %v1695, %v1694
        %v1697 = vsub.s32 4, %v1673
        %v1698 = vsel %vm1575, %v1697, %v1673
        %v1699 = vsel %vm1574, %v1107, %v1696
        %v1700 = vsel %vm1574, 0, %v1698
        %v1701 = vmul.f32 %v1699, %v1699
        %v1702 = vmul.f32 %v1701, -0.001358992
        %v1703 = vadd.f32 %v1702, 0.041655596
        %v1704 = vmul.f32 %v1701, %v1703
        %v1705 = vadd.f32 %v1704, -0.4999988
        %v1706 = vmul.f32 %v1701, %v1705
        %v1707 = vadd.f32 1.0, %v1706
        %v1708 = vmul.f32 %v1699, %v1699
        %v1709 = vmul.f32 %v1708, -0.00019511016
        %v1710 = vadd.f32 %v1709, 0.008332121
        %v1711 = vmul.f32 %v1708, %v1710
        %v1712 = vadd.f32 %v1711, -0.16666654
        %v1713 = vmul.f32 %v1708, %v1712
        %v1714 = vadd.f32 %v1713, 1.0
        %v1715 = vmul.f32 %v1714, %v1699
        %vm1716 = vweird.f32 %v1107
        %v1717 = vadd.s32 %v1700, 3
        %v1718 = vand.u32 %v1717, 3
        %vm1719 = vcmp.lt.s32.totalorder %v1718, 2
        %vm1720 = vcmp.eq.s32.totalorder %v1718, 0
        %v1721 = vxor.u32 %v1715, 2147483648
        %v1722 = vsel %vm1720, %v1707, %v1721
        %vm1723 = vcmp.eq.s32.totalorder %v1718, 2
        %v1724 = vxor.u32 %v1707, 2147483648
        %v1725 = vsel %vm1723, %v1724, %v1715
        %v1726 = vsel %vm1719, %v1722, %v1725
        %v1727 = vsel %vm1716, nan, %v1726
        %v1728 = vand.u32 2147483647, %v1262
        %v1729 = vand.u32 2147483647, %v1417
        %v1730 = vand.u32 2147483647, %v1572
        %v1731 = vand.u32 2147483647, %v1727
        %1732 = vadd.xlane.f32.xlu0 %v1728
        %v1733 = vpop.xlane.xlu0 %1732
        %1734 = vadd.xlane.f32.xlu0 %v1729
        %v1735 = vpop.xlane.xlu0 %1734
        %1736 = vadd.xlane.f32.xlu0 %v1730
        %v1737 = vpop.xlane.xlu0 %1736
        %1738 = vadd.xlane.f32.xlu0 %v1731
        %v1739 = vpop.xlane.xlu0 %1738
        %s1740 = sld [smem:[#allocation2]]
        %s1741 = sld [smem:[#allocation2 + $0x1]]
        %v1742 = vstv %s1741
        %v1743 = vmul.f32 %v1742, %v1059
        %v1744 = vmul.f32 %v1742, %v1071
        %v1745 = vmul.f32 %v1742, %v1083
        %v1746 = vmul.f32 %v1742, %v1095
        %v1747 = vstv %s1740
        %v1748 = vmul.f32 %v1747, %v1733
        %v1749 = vmul.f32 %v1747, %v1735
        %v1750 = vmul.f32 %v1747, %v1737
        %v1751 = vmul.f32 %v1747, %v1739
        %v1752 = vadd.f32 %v1743, %v1748
        %v1753 = vadd.f32 %v1744, %v1749
        %v1754 = vadd.f32 %v1745, %v1750
        %v1755 = vadd.f32 %v1746, %v1751
        %v1756 = vsub.f32 0.0, %v1752
        %v1757 = vsub.f32 0.0, %v1753
        %v1758 = vsub.f32 0.0, %v1754
        %v1759 = vsub.f32 0.0, %v1755
        %vm1760 = vcmask 7168
        %1761 = vst.msk [vmem:[%s459] sm:$0xff] %vm1760, %v1756
        %1762 = vst.msk [vmem:[%s459 + $0x8] sm:$0xff] %vm1760, %v1757
        %1763 = vst.msk [vmem:[%s459 + $0x10] sm:$0xff] %vm1760, %v1758
        %1764 = vst.msk [vmem:[%s459 + $0x18] sm:$0xff] %vm1760, %v1759
        %s1765 = smul.u32 4, %s26
        %p1766 = scmp.lt.s32.totalorder %s1765, 15
        %s1767 = scalar_select %p1766, %s1765, 15
        %s1768 = smul.addr %s1767, 8
        %s1769 = scalar_lea.vmem %s7, %s1768
        // Predicated region
        $region69: #{tpu_custom_call.1} parent=47 // pred_check
          %p1770 = pneg %p216
        $region70: #{tpu_custom_call.1} parent=47 // pred_check_branch
          %1772 = sbr.rel (%p1770) target = $region72
        $region71: #{tpu_custom_call.1} parent=47 // pred_region
          %s1773 = smul.u32 4, %s26
        $region72: #{tpu_custom_call.1} parent=47 // pred_fallthru
          _
      $region48: #{tpu_custom_call.1} parent=5 // pred_fallthru
        _
      %p1774 = scmp.le.s32.totalorder 2, %s21
      // Predicated region
      $region73: #{tpu_custom_call.1} parent=5 // pred_check
        %p1775 = pneg %p1774
      $region74: #{tpu_custom_call.1} parent=5 // pred_check_branch
        %1777 = sbr.rel (%p1775) target = $region76
      $region75: #{tpu_custom_call.1} parent=5 // pred_region
        %s1778 = ssub.s32 %s21, 2
        // Predicated region
        $region77: #{tpu_custom_call.1} parent=75 // pred_check
          %p1779 = pneg %p222
        $region78: #{tpu_custom_call.1} parent=75 // pred_check_branch
          %1781 = sbr.rel (%p1779) target = $region80
        $region79: #{tpu_custom_call.1} parent=75 // pred_region
          %s1782 = smul.u32 4, %s27
          %p1783 = scmp.lt.s32.totalorder %s1782, 15
          %s1784 = scalar_select %p1783, %s1782, 15
          %s1785 = smul.addr %s1784, 8
          %s1786 = scalar_lea.vmem %s7, %s1785
        $region80: #{tpu_custom_call.1} parent=75 // pred_fallthru
          _
      $region76: #{tpu_custom_call.1} parent=5 // pred_fallthru
        _
    $region6: #{tpu_custom_call.1} parent=1 // loop_footer
      %s25 = sadd.s32 1, %s21
    $region7: #{tpu_custom_call.1} parent=1 // loop_footer_branch
      %20 = sbr.rel target = $region3
    $region8: #{tpu_custom_call.1} parent=1 // loop_exit
      _
    %1787 = vsyncpa [#allocation3], 1
    %s1788 = scalar_lea.sflag [#allocation3], 1
    %1789 = vsyncpa %s1788, 1
    %1790 = vsyncpa [#allocation7], 1
    %s1791 = scalar_lea.sflag [#allocation7], 1
    %1792 = vsyncpa %s1791, 1
    %1793 = vsyncpa [#allocation10], 1
    %s1794 = scalar_lea.sflag [#allocation10], 1
    %1795 = vsyncpa %s1794, 1
    %1796 = vsyncpa [#allocation4], 1
    %s1797 = scalar_lea.sflag [#allocation4], 1
    %1798 = vsyncpa %s1797, 1

</llo_original>
